<compile_context>
chip_gen: v6e
topology: v6e:2x2x1
jax: 0.10.0
libtpu: 0.0.40
codegen_flags: <defaults>
</compile_context>

<pallas_src>
import jax
import jax.numpy as jnp
from jax.experimental import pallas as pl
from jax.experimental.pallas import tpu as pltpu

EPS = 1e-5          # nn.BatchNorm2d default
NEG_SLOPE = 0.01    # nn.LeakyReLU default negative_slope
VMEM_LIMIT = 32 * 1024 * 1024   # explicit scoped-VMEM budget (fits all gens)


def _round_up(x, m):
    return ((x + m - 1) // m) * m


# --------------------------------------------------------------------------
# Pass 1: tiled matmul (bf16 in, f32 acc) + per-tile BN statistics
# --------------------------------------------------------------------------
def _matmul_stats_kernel(x_ref, w_ref, y_ref, stats_ref):
    # x_ref: (TR, KKC) bf16   w_ref: (KKC, Cp) bf16 (VMEM-resident across grid)
    # y_ref: (TR, Cp) f32     stats_ref: (8, Cp) f32  (rows 0/1 = sum / sumsq)
    y = jnp.dot(x_ref[...], w_ref[...], preferred_element_type=jnp.float32)
    y_ref[...] = y
    stats_ref[0:1, :] = jnp.sum(y, axis=0, keepdims=True)
    stats_ref[1:2, :] = jnp.sum(y * y, axis=0, keepdims=True)


# --------------------------------------------------------------------------
# Pass 2: normalize (global stats folded into per-channel scale/shift) + LeakyReLU
# --------------------------------------------------------------------------
def _bn_lrelu_kernel(y_ref, scale_ref, shift_ref, o_ref):
    z = y_ref[...] * scale_ref[...] + shift_ref[...]
    o_ref[...] = jnp.where(z >= 0, z, NEG_SLOPE * z).astype(o_ref.dtype)


# --------------------------------------------------------------------------
# Host-side glue
# --------------------------------------------------------------------------
def _im2col(x_nhwc, k, stride):
    """Extract conv patches in bf16; returns (N*Ho*Wo, k*k*Cin) and out dims.

    # TODO(synk): extract patches from VMEM-resident tiles inside the kernel
    # (k*k shifted matmuls) to remove the k*k-inflated HBM read entirely.
    """
    N, H, W, C = x_nhwc.shape
    p = k // 2
    xp = jnp.pad(x_nhwc, ((0, 0), (p, p), (p, p), (0, 0)))
    Ho = (H + 2 * p - k) // stride + 1
    Wo = (W + 2 * p - k) // stride + 1
    cols = []
    for dy in range(k):
        for dx in range(k):
            cols.append(xp[:, dy:dy + stride * (Ho - 1) + 1:stride,
                              dx:dx + stride * (Wo - 1) + 1:stride, :])
    patches = jnp.stack(cols, axis=3)                       # (N,Ho,Wo,k*k,C)
    return (patches.reshape(N * Ho * Wo, k * k * C).astype(jnp.bfloat16),
            (N, Ho, Wo))


def _stage(x_nhwc, w_oikk, gamma, beta, k, stride, out_dtype):
    """One conv->BN->LeakyReLU stage. Conv bias omitted (cancelled by BN)."""
    Cout, Cin = w_oikk.shape[0], w_oikk.shape[1]
    cols, (N, Ho, Wo) = _im2col(x_nhwc, k, stride)
    R, KKC = cols.shape

    # Lane-dense output channels (multiple of 128).
    Cp = _round_up(max(Cout, 128), 128)
    # Row tile: <=512 rows keeps 2x-buffered bf16 patch tiles + f32 y tiles
    # far under the 16/32 MiB scoped-VMEM budgets on v5e/v6e/v7x.
    TR = min(512, _round_up(R, 8))
    num_tiles = (R + TR - 1) // TR
    R_pad = num_tiles * TR
    if R_pad != R:
        # Zero rows contribute 0 to sum/sumsq, so stats stay exact.
        cols = jnp.pad(cols, ((0, R_pad - R), (0, 0)))

    # PyTorch weight (Cout,Cin,K,K) -> (K,K,Cin,Cout) -> (K*K*Cin, Cout),
    # matching the (dy, dx, cin) patch ordering; pad Cout and cast to bf16.
    w2d = jnp.transpose(w_oikk, (2, 3, 1, 0)).reshape(k * k * Cin, Cout)
    w2d = jnp.pad(w2d, ((0, 0), (0, Cp - Cout))).astype(jnp.bfloat16)

    cparams = pltpu.CompilerParams(dimension_semantics=("parallel",),
                                   vmem_limit_bytes=VMEM_LIMIT)

    # ---- pass 1: conv matmul + per-tile statistics -------------------------
    y, stats = pl.pallas_call(
        _matmul_stats_kernel,
        out_shape=(jax.ShapeDtypeStruct((R_pad, Cp), jnp.float32),
                   jax.ShapeDtypeStruct((num_tiles, 8, Cp), jnp.float32)),
        grid_spec=pltpu.PrefetchScalarGridSpec(
            num_scalar_prefetch=0,
            grid=(num_tiles,),
            in_specs=[pl.BlockSpec((TR, KKC), lambda i: (i, 0)),
                      pl.BlockSpec((KKC, Cp), lambda i: (0, 0))],   # resident
            out_specs=[pl.BlockSpec((TR, Cp), lambda i: (i, 0)),
                       pl.BlockSpec((None, 8, Cp), lambda i: (i, 0, 0))]),
        compiler_params=cparams,
    )(cols, w2d)

    # ---- global BN statistics (true row count R, biased variance) ----------
    col_sum = jnp.sum(stats[:, 0, :], axis=0)
    col_sumsq = jnp.sum(stats[:, 1, :], axis=0)
    mean = col_sum / R
    var = jnp.maximum(col_sumsq / R - mean * mean, 0.0)
    gamma_p = jnp.pad(gamma.astype(jnp.float32), (0, Cp - Cout),
                      constant_values=1.0)
    beta_p = jnp.pad(beta.astype(jnp.float32), (0, Cp - Cout))
    scale = gamma_p * jax.lax.rsqrt(var + EPS)
    shift = beta_p - mean * scale

    # ---- pass 2: normalize + LeakyReLU (mem-bound streaming) ---------------
    out2d = pl.pallas_call(
        _bn_lrelu_kernel,
        out_shape=jax.ShapeDtypeStruct((R_pad, Cp), out_dtype),
        grid_spec=pltpu.PrefetchScalarGridSpec(
            num_scalar_prefetch=0,
            grid=(num_tiles,),
            in_specs=[pl.BlockSpec((TR, Cp), lambda i: (i, 0)),
                      pl.BlockSpec((1, Cp), lambda i: (0, 0)),      # resident
                      pl.BlockSpec((1, Cp), lambda i: (0, 0))],     # resident
            out_specs=pl.BlockSpec((TR, Cp), lambda i: (i, 0))),
        compiler_params=cparams,
    )(y, scale.reshape(1, Cp), shift.reshape(1, Cp))

    return out2d[:R, :Cout].reshape(N, Ho, Wo, Cout)


def discrim_block_forward(x_nchw, params, k):
    x = jnp.transpose(x_nchw, (0, 2, 3, 1)).astype(jnp.bfloat16)  # NCHW -> NHWC
    (w1, _b1, g1, be1), (w2, _b2, g2, be2) = params
    # bias args (_b1/_b2) intentionally unused: exactly cancelled by BatchNorm.
    x = _stage(x, w1, g1, be1, k, stride=1, out_dtype=jnp.bfloat16)
    x = _stage(x, w2, g2, be2, k, stride=2, out_dtype=jnp.float32)
    return jnp.transpose(x, (0, 3, 1, 2))                         # NHWC -> NCHW


def init_params(key, in_feats, out_feats, k):
    """Matches _conv.__init__: weight ~ N(0, 0.02), bias = 0; BN gamma=1, beta=0."""
    k1, k2 = jax.random.split(key)
    w1 = 0.02 * jax.random.normal(k1, (out_feats, in_feats, k, k), jnp.float32)
    w2 = 0.02 * jax.random.normal(k2, (out_feats, out_feats, k, k), jnp.float32)
    zeros_o = jnp.zeros((out_feats,), jnp.float32)
    ones_o = jnp.ones((out_feats,), jnp.float32)
    return ((w1, zeros_o, ones_o, zeros_o),
            (w2, zeros_o, ones_o, zeros_o))


if __name__ == "__main__":
    key = jax.random.PRNGKey(0)
    kx, kp = jax.random.split(key)
    N, Cin, H, W = 2, 4, 16, 16
    Cout, K = 8, 3
    x = jax.random.normal(kx, (N, Cin, H, W), jnp.float32)
    params = init_params(kp, Cin, Cout, K)

    fwd = jax.jit(discrim_block_forward, static_argnums=2)
    out = fwd(x, params, K)
    jax.block_until_ready(out)
    assert out.shape == (N, Cout, H // 2, W // 2), out.shape
    assert bool(jnp.all(jnp.isfinite(out)))
    print("KERNEL_OK")
</pallas_src>

<mosaic_0001>
module attributes {stable_mosaic.version = 11 : i64} {
  func.func @_matmul_stats_kernel(%arg0: i32, %arg1: memref<512x36xbf16, #tpu.memory_space<vmem>>, %arg2: memref<36x128xbf16, #tpu.memory_space<vmem>>, %arg3: memref<512x128xf32, #tpu.memory_space<vmem>>, %arg4: memref<1x8x128xf32, #tpu.memory_space<vmem>>) attributes {dimension_semantics = [#tpu.dimension_semantics<parallel>], iteration_bounds = array<i64: 1>, scalar_prefetch = 0 : i64, scratch_operands = 0 : i64, tpu.core_type = #tpu.core_type<tc>, window_params = [{transform_indices = @transform_0, window_bounds = array<i64: 512, 36>}, {pipeline_mode = #tpu.pipeline_mode<synchronous>, transform_indices = @transform_1, window_bounds = array<i64: 36, 128>}, {transform_indices = @transform_2, window_bounds = array<i64: 512, 128>}, {transform_indices = @transform_3, window_bounds = array<i64: 1, 8, 128>}]} {
    %c0 = arith.constant 0 : index
    %c0_0 = arith.constant 0 : index
    %0 = vector.load %arg1[%c0, %c0_0] : memref<512x36xbf16, #tpu.memory_space<vmem>>, vector<512x36xbf16>
    %c0_1 = arith.constant 0 : index
    %c0_2 = arith.constant 0 : index
    %1 = vector.load %arg2[%c0_1, %c0_2] : memref<36x128xbf16, #tpu.memory_space<vmem>>, vector<36x128xbf16>
    %cst = arith.constant dense<0.000000e+00> : vector<512x128xf32>
    %2 = tpu.matmul %0, %1, %cst {dimension_numbers = #tpu.dot_dimension_numbers<[1], [0], [0], [1], [0, 0, 1, 1], [], []>} : vector<512x36xbf16>, vector<36x128xbf16>, vector<512x128xf32> -> vector<512x128xf32>
    %c0_3 = arith.constant 0 : index
    %c0_4 = arith.constant 0 : index
    %3 = vector.load %arg3[%c0_3, %c0_4] : memref<512x128xf32, #tpu.memory_space<vmem>>, vector<512x128xf32>
    tpu.vector_store %arg3[%c0_3, %c0_4], %2 {strides = array<i32>} : memref<512x128xf32, #tpu.memory_space<vmem>>, vector<512x128xf32>,
    %cst_5 = arith.constant dense<0.000000e+00> : vector<128xf32>
    %4 = vector.multi_reduction <add>, %2, %cst_5 [0] : vector<512x128xf32> to vector<128xf32>
    %5 = vector.shape_cast %4 : vector<128xf32> to vector<1x128xf32>
    %c0_6 = arith.constant 0 : index
    %c0_7 = arith.constant 0 : index
    %c0_8 = arith.constant 0 : index
    %6 = vector.load %arg4[%c0_6, %c0_7, %c0_8] : memref<1x8x128xf32, #tpu.memory_space<vmem>>, vector<1x1x128xf32>
    %7 = vector.shape_cast %6 : vector<1x1x128xf32> to vector<1x128xf32>
    %8 = vector.shape_cast %5 : vector<1x128xf32> to vector<1x1x128xf32>
    tpu.vector_store %arg4[%c0_6, %c0_7, %c0_8], %8 {strides = array<i32>} : memref<1x8x128xf32, #tpu.memory_space<vmem>>, vector<1x1x128xf32>,
    %9 = arith.mulf %2, %2 : vector<512x128xf32>
    %cst_9 = arith.constant dense<0.000000e+00> : vector<128xf32>
    %10 = vector.multi_reduction <add>, %9, %cst_9 [0] : vector<512x128xf32> to vector<128xf32>
    %11 = vector.shape_cast %10 : vector<128xf32> to vector<1x128xf32>
    %c0_10 = arith.constant 0 : index
    %c1 = arith.constant 1 : index
    %c0_11 = arith.constant 0 : index
    %12 = vector.load %arg4[%c0_10, %c1, %c0_11] : memref<1x8x128xf32, #tpu.memory_space<vmem>>, vector<1x1x128xf32>
    %13 = vector.shape_cast %12 : vector<1x1x128xf32> to vector<1x128xf32>
    %14 = vector.shape_cast %11 : vector<1x128xf32> to vector<1x1x128xf32>
    tpu.vector_store %arg4[%c0_10, %c1, %c0_11], %14 {strides = array<i32>} : memref<1x8x128xf32, #tpu.memory_space<vmem>>, vector<1x1x128xf32>,
    return
  }
  func.func @transform_0(%arg0: i32) -> (i32, i32) {
    %c0_i32 = arith.constant 0 : i32
    %c0_i32_0 = arith.constant 0 : i32
    return %arg0, %c0_i32 : i32, i32
  }
  func.func @transform_1(%arg0: i32) -> (i32, i32) {
    %c0_i32 = arith.constant 0 : i32
    %c0_i32_0 = arith.constant 0 : i32
    %c0_i32_1 = arith.constant 0 : i32
    return %c0_i32, %c0_i32_0 : i32, i32
  }
  func.func @transform_2(%arg0: i32) -> (i32, i32) {
    %c0_i32 = arith.constant 0 : i32
    %c0_i32_0 = arith.constant 0 : i32
    return %arg0, %c0_i32 : i32, i32
  }
  func.func @transform_3(%arg0: i32) -> (i32, i32, i32) {
    %c0_i32 = arith.constant 0 : i32
    %c0_i32_0 = arith.constant 0 : i32
    %c0_i32_1 = arith.constant 0 : i32
    return %arg0, %c0_i32, %c0_i32_0 : i32, i32, i32
  }
}

module attributes {stable_mosaic.version = 11 : i64} {
  func.func @_bn_lrelu_kernel(%arg0: i32, %arg1: memref<512x128xf32, #tpu.memory_space<vmem>>, %arg2: memref<1x128xf32, #tpu.memory_space<vmem>>, %arg3: memref<1x128xf32, #tpu.memory_space<vmem>>, %arg4: memref<512x128xbf16, #tpu.memory_space<vmem>>) attributes {dimension_semantics = [#tpu.dimension_semantics<parallel>], iteration_bounds = array<i64: 1>, scalar_prefetch = 0 : i64, scratch_operands = 0 : i64, tpu.core_type = #tpu.core_type<tc>, window_params = [{transform_indices = @transform_0, window_bounds = array<i64: 512, 128>}, {pipeline_mode = #tpu.pipeline_mode<synchronous>, transform_indices = @transform_1, window_bounds = array<i64: 1, 128>}, {pipeline_mode = #tpu.pipeline_mode<synchronous>, transform_indices = @transform_2, window_bounds = array<i64: 1, 128>}, {transform_indices = @transform_3, window_bounds = array<i64: 512, 128>}]} {
    %c0 = arith.constant 0 : index
    %c0_0 = arith.constant 0 : index
    %0 = vector.load %arg1[%c0, %c0_0] : memref<512x128xf32, #tpu.memory_space<vmem>>, vector<512x128xf32>
    %c0_1 = arith.constant 0 : index
    %c0_2 = arith.constant 0 : index
    %1 = vector.load %arg2[%c0_1, %c0_2] : memref<1x128xf32, #tpu.memory_space<vmem>>, vector<1x128xf32>
    %2 = vector.broadcast %1 : vector<1x128xf32> to vector<512x128xf32>
    %3 = arith.mulf %0, %2 : vector<512x128xf32>
    %c0_3 = arith.constant 0 : index
    %c0_4 = arith.constant 0 : index
    %4 = vector.load %arg3[%c0_3, %c0_4] : memref<1x128xf32, #tpu.memory_space<vmem>>, vector<1x128xf32>
    %5 = vector.broadcast %4 : vector<1x128xf32> to vector<512x128xf32>
    %6 = arith.addf %3, %5 : vector<512x128xf32>
    %cst = arith.constant 0.000000e+00 : f32
    %7 = vector.broadcast %cst : f32 to vector<512x128xf32>
    %8 = arith.cmpf oge, %6, %7 : vector<512x128xf32>
    %cst_5 = arith.constant 0.00999999977 : f32
    %9 = vector.broadcast %cst_5 : f32 to vector<512x128xf32>
    %10 = arith.mulf %9, %6 : vector<512x128xf32>
    %11 = arith.select %8, %6, %10 : vector<512x128xi1>, vector<512x128xf32>
    %12 = arith.truncf %11 : vector<512x128xf32> to vector<512x128xbf16>
    %c0_6 = arith.constant 0 : index
    %c0_7 = arith.constant 0 : index
    %13 = vector.load %arg4[%c0_6, %c0_7] : memref<512x128xbf16, #tpu.memory_space<vmem>>, vector<512x128xbf16>
    tpu.vector_store %arg4[%c0_6, %c0_7], %12 {strides = array<i32>} : memref<512x128xbf16, #tpu.memory_space<vmem>>, vector<512x128xbf16>,
    return
  }
  func.func @transform_0(%arg0: i32) -> (i32, i32) {
    %c0_i32 = arith.constant 0 : i32
    %c0_i32_0 = arith.constant 0 : i32
    return %arg0, %c0_i32 : i32, i32
  }
  func.func @transform_1(%arg0: i32) -> (i32, i32) {
    %c0_i32 = arith.constant 0 : i32
    %c0_i32_0 = arith.constant 0 : i32
    %c0_i32_1 = arith.constant 0 : i32
    return %c0_i32, %c0_i32_0 : i32, i32
  }
  func.func @transform_2(%arg0: i32) -> (i32, i32) {
    %c0_i32 = arith.constant 0 : i32
    %c0_i32_0 = arith.constant 0 : i32
    %c0_i32_1 = arith.constant 0 : i32
    return %c0_i32, %c0_i32_0 : i32, i32
  }
  func.func @transform_3(%arg0: i32) -> (i32, i32) {
    %c0_i32 = arith.constant 0 : i32
    %c0_i32_0 = arith.constant 0 : i32
    return %arg0, %c0_i32 : i32, i32
  }
}

module attributes {stable_mosaic.version = 11 : i64} {
  func.func @_matmul_stats_kernel(%arg0: i32, %arg1: memref<128x72xbf16, #tpu.memory_space<vmem>>, %arg2: memref<72x128xbf16, #tpu.memory_space<vmem>>, %arg3: memref<128x128xf32, #tpu.memory_space<vmem>>, %arg4: memref<1x8x128xf32, #tpu.memory_space<vmem>>) attributes {dimension_semantics = [#tpu.dimension_semantics<parallel>], iteration_bounds = array<i64: 1>, scalar_prefetch = 0 : i64, scratch_operands = 0 : i64, tpu.core_type = #tpu.core_type<tc>, window_params = [{transform_indices = @transform_0, window_bounds = array<i64: 128, 72>}, {pipeline_mode = #tpu.pipeline_mode<synchronous>, transform_indices = @transform_1, window_bounds = array<i64: 72, 128>}, {transform_indices = @transform_2, window_bounds = array<i64: 128, 128>}, {transform_indices = @transform_3, window_bounds = array<i64: 1, 8, 128>}]} {
    %c0 = arith.constant 0 : index
    %c0_0 = arith.constant 0 : index
    %0 = vector.load %arg1[%c0, %c0_0] : memref<128x72xbf16, #tpu.memory_space<vmem>>, vector<128x72xbf16>
    %c0_1 = arith.constant 0 : index
    %c0_2 = arith.constant 0 : index
    %1 = vector.load %arg2[%c0_1, %c0_2] : memref<72x128xbf16, #tpu.memory_space<vmem>>, vector<72x128xbf16>
    %cst = arith.constant dense<0.000000e+00> : vector<128x128xf32>
    %2 = tpu.matmul %0, %1, %cst {dimension_numbers = #tpu.dot_dimension_numbers<[1], [0], [0], [1], [0, 0, 1, 1], [], []>} : vector<128x72xbf16>, vector<72x128xbf16>, vector<128x128xf32> -> vector<128x128xf32>
    %c0_3 = arith.constant 0 : index
    %c0_4 = arith.constant 0 : index
    %3 = vector.load %arg3[%c0_3, %c0_4] : memref<128x128xf32, #tpu.memory_space<vmem>>, vector<128x128xf32>
    tpu.vector_store %arg3[%c0_3, %c0_4], %2 {strides = array<i32>} : memref<128x128xf32, #tpu.memory_space<vmem>>, vector<128x128xf32>,
    %cst_5 = arith.constant dense<0.000000e+00> : vector<128xf32>
    %4 = vector.multi_reduction <add>, %2, %cst_5 [0] : vector<128x128xf32> to vector<128xf32>
    %5 = vector.shape_cast %4 : vector<128xf32> to vector<1x128xf32>
    %c0_6 = arith.constant 0 : index
    %c0_7 = arith.constant 0 : index
    %c0_8 = arith.constant 0 : index
    %6 = vector.load %arg4[%c0_6, %c0_7, %c0_8] : memref<1x8x128xf32, #tpu.memory_space<vmem>>, vector<1x1x128xf32>
    %7 = vector.shape_cast %6 : vector<1x1x128xf32> to vector<1x128xf32>
    %8 = vector.shape_cast %5 : vector<1x128xf32> to vector<1x1x128xf32>
    tpu.vector_store %arg4[%c0_6, %c0_7, %c0_8], %8 {strides = array<i32>} : memref<1x8x128xf32, #tpu.memory_space<vmem>>, vector<1x1x128xf32>,
    %9 = arith.mulf %2, %2 : vector<128x128xf32>
    %cst_9 = arith.constant dense<0.000000e+00> : vector<128xf32>
    %10 = vector.multi_reduction <add>, %9, %cst_9 [0] : vector<128x128xf32> to vector<128xf32>
    %11 = vector.shape_cast %10 : vector<128xf32> to vector<1x128xf32>
    %c0_10 = arith.constant 0 : index
    %c1 = arith.constant 1 : index
    %c0_11 = arith.constant 0 : index
    %12 = vector.load %arg4[%c0_10, %c1, %c0_11] : memref<1x8x128xf32, #tpu.memory_space<vmem>>, vector<1x1x128xf32>
    %13 = vector.shape_cast %12 : vector<1x1x128xf32> to vector<1x128xf32>
    %14 = vector.shape_cast %11 : vector<1x128xf32> to vector<1x1x128xf32>
    tpu.vector_store %arg4[%c0_10, %c1, %c0_11], %14 {strides = array<i32>} : memref<1x8x128xf32, #tpu.memory_space<vmem>>, vector<1x1x128xf32>,
    return
  }
  func.func @transform_0(%arg0: i32) -> (i32, i32) {
    %c0_i32 = arith.constant 0 : i32
    %c0_i32_0 = arith.constant 0 : i32
    return %arg0, %c0_i32 : i32, i32
  }
  func.func @transform_1(%arg0: i32) -> (i32, i32) {
    %c0_i32 = arith.constant 0 : i32
    %c0_i32_0 = arith.constant 0 : i32
    %c0_i32_1 = arith.constant 0 : i32
    return %c0_i32, %c0_i32_0 : i32, i32
  }
  func.func @transform_2(%arg0: i32) -> (i32, i32) {
    %c0_i32 = arith.constant 0 : i32
    %c0_i32_0 = arith.constant 0 : i32
    return %arg0, %c0_i32 : i32, i32
  }
  func.func @transform_3(%arg0: i32) -> (i32, i32, i32) {
    %c0_i32 = arith.constant 0 : i32
    %c0_i32_0 = arith.constant 0 : i32
    %c0_i32_1 = arith.constant 0 : i32
    return %arg0, %c0_i32, %c0_i32_0 : i32, i32, i32
  }
}

module attributes {stable_mosaic.version = 11 : i64} {
  func.func @_bn_lrelu_kernel(%arg0: i32, %arg1: memref<128x128xf32, #tpu.memory_space<vmem>>, %arg2: memref<1x128xf32, #tpu.memory_space<vmem>>, %arg3: memref<1x128xf32, #tpu.memory_space<vmem>>, %arg4: memref<128x128xf32, #tpu.memory_space<vmem>>) attributes {dimension_semantics = [#tpu.dimension_semantics<parallel>], iteration_bounds = array<i64: 1>, scalar_prefetch = 0 : i64, scratch_operands = 0 : i64, tpu.core_type = #tpu.core_type<tc>, window_params = [{transform_indices = @transform_0, window_bounds = array<i64: 128, 128>}, {pipeline_mode = #tpu.pipeline_mode<synchronous>, transform_indices = @transform_1, window_bounds = array<i64: 1, 128>}, {pipeline_mode = #tpu.pipeline_mode<synchronous>, transform_indices = @transform_2, window_bounds = array<i64: 1, 128>}, {transform_indices = @transform_3, window_bounds = array<i64: 128, 128>}]} {
    %c0 = arith.constant 0 : index
    %c0_0 = arith.constant 0 : index
    %0 = vector.load %arg1[%c0, %c0_0] : memref<128x128xf32, #tpu.memory_space<vmem>>, vector<128x128xf32>
    %c0_1 = arith.constant 0 : index
    %c0_2 = arith.constant 0 : index
    %1 = vector.load %arg2[%c0_1, %c0_2] : memref<1x128xf32, #tpu.memory_space<vmem>>, vector<1x128xf32>
    %2 = vector.broadcast %1 : vector<1x128xf32> to vector<128x128xf32>
    %3 = arith.mulf %0, %2 : vector<128x128xf32>
    %c0_3 = arith.constant 0 : index
    %c0_4 = arith.constant 0 : index
    %4 = vector.load %arg3[%c0_3, %c0_4] : memref<1x128xf32, #tpu.memory_space<vmem>>, vector<1x128xf32>
    %5 = vector.broadcast %4 : vector<1x128xf32> to vector<128x128xf32>
    %6 = arith.addf %3, %5 : vector<128x128xf32>
    %cst = arith.constant 0.000000e+00 : f32
    %7 = vector.broadcast %cst : f32 to vector<128x128xf32>
    %8 = arith.cmpf oge, %6, %7 : vector<128x128xf32>
    %cst_5 = arith.constant 0.00999999977 : f32
    %9 = vector.broadcast %cst_5 : f32 to vector<128x128xf32>
    %10 = arith.mulf %9, %6 : vector<128x128xf32>
    %11 = arith.select %8, %6, %10 : vector<128x128xi1>, vector<128x128xf32>
    %c0_6 = arith.constant 0 : index
    %c0_7 = arith.constant 0 : index
    %12 = vector.load %arg4[%c0_6, %c0_7] : memref<128x128xf32, #tpu.memory_space<vmem>>, vector<128x128xf32>
    tpu.vector_store %arg4[%c0_6, %c0_7], %11 {strides = array<i32>} : memref<128x128xf32, #tpu.memory_space<vmem>>, vector<128x128xf32>,
    return
  }
  func.func @transform_0(%arg0: i32) -> (i32, i32) {
    %c0_i32 = arith.constant 0 : i32
    %c0_i32_0 = arith.constant 0 : i32
    return %arg0, %c0_i32 : i32, i32
  }
  func.func @transform_1(%arg0: i32) -> (i32, i32) {
    %c0_i32 = arith.constant 0 : i32
    %c0_i32_0 = arith.constant 0 : i32
    %c0_i32_1 = arith.constant 0 : i32
    return %c0_i32, %c0_i32_0 : i32, i32
  }
  func.func @transform_2(%arg0: i32) -> (i32, i32) {
    %c0_i32 = arith.constant 0 : i32
    %c0_i32_0 = arith.constant 0 : i32
    %c0_i32_1 = arith.constant 0 : i32
    return %c0_i32, %c0_i32_0 : i32, i32
  }
  func.func @transform_3(%arg0: i32) -> (i32, i32) {
    %c0_i32 = arith.constant 0 : i32
    %c0_i32_0 = arith.constant 0 : i32
    return %arg0, %c0_i32 : i32, i32
  }
}

</mosaic_0001>

<llo_original>
// kernel: discrim_block_forward.5
$region0: #{discrim_block_forward.5}
  #allocation0 [shape = 'u32[]', space=smem, size = 0x4, offset = 0x4, fixed_abs, tag = 'smem constant byte address 0x4 - core index']
  #allocation1 [shape = 'u32[144,128]{1,0:T(1,128)}', space=vmem, size = 0x12000, scoped, tag = 'internal scratch']
  %s0 = inlined_call_operand.vmem [shape: f32[512,128], index: 0, kind: input, shape index: {}]
  %s1 = inlined_call_operand.vmem [shape: f32[1,128], index: 1, kind: input, shape index: {}]
  %s2 = inlined_call_operand.vmem [shape: f32[1,128], index: 2, kind: input, shape index: {}]
  %s3 = inlined_call_operand.vmem [shape: bf16[512,128], index: 3, kind: output, shape index: {}]
  %s4 = sld [smem:[#allocation0]]
  $region22: #{discrim_block_forward.5} parent=0
    _
  %s6 = ssub.s32 1, %s4
  %s7 = scalar_select 0, %s6, %s4
  // Predicated region
  $region2: #{discrim_block_forward.5} parent=0 // pred_check
    _
  $region3: #{discrim_block_forward.5} parent=0 // pred_check_branch
    %9 = sbr.rel (0) target = $region5
  $region4: #{discrim_block_forward.5} parent=0 // pred_region
    _
  $region5: #{discrim_block_forward.5} parent=0 // pred_fallthru
    _
  // Predicated region
  $region6: #{discrim_block_forward.5} parent=0 // pred_check
    _
  $region7: #{discrim_block_forward.5} parent=0 // pred_check_branch
    %11 = sbr.rel (0) target = $region9
  $region8: #{discrim_block_forward.5} parent=0 // pred_region
    _
  $region9: #{discrim_block_forward.5} parent=0 // pred_fallthru
    _
  // Predicated region
  $region10: #{discrim_block_forward.5} parent=0 // pred_check
    _
  $region11: #{discrim_block_forward.5} parent=0 // pred_check_branch
    %13 = sbr.rel (0) target = $region13
  $region12: #{discrim_block_forward.5} parent=0 // pred_region
    _
  $region13: #{discrim_block_forward.5} parent=0 // pred_fallthru
    _
  %v14 = vld [vmem:[%s0] sm:$0xff]
  %v15 = vld [vmem:[%s0 + $0x8] sm:$0xff]
  %v16 = vld [vmem:[%s0 + $0x10] sm:$0xff]
  %v17 = vld [vmem:[%s0 + $0x18] sm:$0xff]
  %v18 = vld [vmem:[%s0 + $0x20] sm:$0xff]
  %v19 = vld [vmem:[%s0 + $0x28] sm:$0xff]
  %v20 = vld [vmem:[%s0 + $0x30] sm:$0xff]
  %v21 = vld [vmem:[%s0 + $0x38] sm:$0xff]
  %v22 = vld [vmem:[%s0 + $0x40] sm:$0xff]
  %v23 = vld [vmem:[%s0 + $0x48] sm:$0xff]
  %v24 = vld [vmem:[%s0 + $0x50] sm:$0xff]
  %v25 = vld [vmem:[%s0 + $0x58] sm:$0xff]
  %v26 = vld [vmem:[%s0 + $0x60] sm:$0xff]
  %v27 = vld [vmem:[%s0 + $0x68] sm:$0xff]
  %v28 = vld [vmem:[%s0 + $0x70] sm:$0xff]
  %v29 = vld [vmem:[%s0 + $0x78] sm:$0xff]
  %v30 = vld [vmem:[%s0 + $0x80] sm:$0xff]
  %v31 = vld [vmem:[%s0 + $0x88] sm:$0xff]
  %v32 = vld [vmem:[%s0 + $0x90] sm:$0xff]
  %v33 = vld [vmem:[%s0 + $0x98] sm:$0xff]
  %v34 = vld [vmem:[%s0 + $0xa0] sm:$0xff]
  %v35 = vld [vmem:[%s0 + $0xa8] sm:$0xff]
  %v36 = vld [vmem:[%s0 + $0xb0] sm:$0xff]
  %v37 = vld [vmem:[%s0 + $0xb8] sm:$0xff]
  %v38 = vld [vmem:[%s0 + $0xc0] sm:$0xff]
  %v39 = vld [vmem:[%s0 + $0xc8] sm:$0xff]
  %v40 = vld [vmem:[%s0 + $0xd0] sm:$0xff]
  %v41 = vld [vmem:[%s0 + $0xd8] sm:$0xff]
  %v42 = vld [vmem:[%s0 + $0xe0] sm:$0xff]
  %v43 = vld [vmem:[%s0 + $0xe8] sm:$0xff]
  %v44 = vld [vmem:[%s0 + $0xf0] sm:$0xff]
  %v45 = vld [vmem:[%s0 + $0xf8] sm:$0xff]
  %v46 = vld [vmem:[%s0 + $0x100] sm:$0xff]
  %v47 = vld [vmem:[%s0 + $0x108] sm:$0xff]
  %v48 = vld [vmem:[%s0 + $0x110] sm:$0xff]
  %v49 = vld [vmem:[%s0 + $0x118] sm:$0xff]
  %v50 = vld [vmem:[%s0 + $0x120] sm:$0xff]
  %v51 = vld [vmem:[%s0 + $0x128] sm:$0xff]
  %v52 = vld [vmem:[%s0 + $0x130] sm:$0xff]
  %v53 = vld [vmem:[%s0 + $0x138] sm:$0xff]
  %v54 = vld [vmem:[%s0 + $0x140] sm:$0xff]
  %v55 = vld [vmem:[%s0 + $0x148] sm:$0xff]
  %v56 = vld [vmem:[%s0 + $0x150] sm:$0xff]
  %v57 = vld [vmem:[%s0 + $0x158] sm:$0xff]
  %v58 = vld [vmem:[%s0 + $0x160] sm:$0xff]
  %v59 = vld [vmem:[%s0 + $0x168] sm:$0xff]
  %v60 = vld [vmem:[%s0 + $0x170] sm:$0xff]
  %v61 = vld [vmem:[%s0 + $0x178] sm:$0xff]
  %v62 = vld [vmem:[%s0 + $0x180] sm:$0xff]
  %v63 = vld [vmem:[%s0 + $0x188] sm:$0xff]
  %v64 = vld [vmem:[%s0 + $0x190] sm:$0xff]
  %v65 = vld [vmem:[%s0 + $0x198] sm:$0xff]
  %v66 = vld [vmem:[%s0 + $0x1a0] sm:$0xff]
  %v67 = vld [vmem:[%s0 + $0x1a8] sm:$0xff]
  %v68 = vld [vmem:[%s0 + $0x1b0] sm:$0xff]
  %v69 = vld [vmem:[%s0 + $0x1b8] sm:$0xff]
  %v70 = vld [vmem:[%s0 + $0x1c0] sm:$0xff]
  %v71 = vld [vmem:[%s0 + $0x1c8] sm:$0xff]
  %v72 = vld [vmem:[%s0 + $0x1d0] sm:$0xff]
  %v73 = vld [vmem:[%s0 + $0x1d8] sm:$0xff]
  %v74 = vld [vmem:[%s0 + $0x1e0] sm:$0xff]
  %v75 = vld [vmem:[%s0 + $0x1e8] sm:$0xff]
  %v76 = vld [vmem:[%s0 + $0x1f0] sm:$0xff]
  %v77 = vld [vmem:[%s0 + $0x1f8] sm:$0xff]
  %v78 = vld [vmem:[%s1] sm:$0x1]
  %v80 = vlaneseq
  %v81 = vshrl.u32 %v80, 7
  %v82 = vsub.s32 0, %v81
  %v83 = vrot.slane %v78, %v82
  %v85 = vmul.f32 %v14, %v83
  %v86 = vmul.f32 %v15, %v83
  %v87 = vmul.f32 %v16, %v83
  %v88 = vmul.f32 %v17, %v83
  %v89 = vmul.f32 %v18, %v83
  %v90 = vmul.f32 %v19, %v83
  %v91 = vmul.f32 %v20, %v83
  %v92 = vmul.f32 %v21, %v83
  %v93 = vmul.f32 %v22, %v83
  %v94 = vmul.f32 %v23, %v83
  %v95 = vmul.f32 %v24, %v83
  %v96 = vmul.f32 %v25, %v83
  %v97 = vmul.f32 %v26, %v83
  %v98 = vmul.f32 %v27, %v83
  %v99 = vmul.f32 %v28, %v83
  %v100 = vmul.f32 %v29, %v83
  %v101 = vmul.f32 %v30, %v83
  %v102 = vmul.f32 %v31, %v83
  %v103 = vmul.f32 %v32, %v83
  %v104 = vmul.f32 %v33, %v83
  %v105 = vmul.f32 %v34, %v83
  %v106 = vmul.f32 %v35, %v83
  %v107 = vmul.f32 %v36, %v83
  %v108 = vmul.f32 %v37, %v83
  %v109 = vmul.f32 %v38, %v83
  %v110 = vmul.f32 %v39, %v83
  %v111 = vmul.f32 %v40, %v83
  %v112 = vmul.f32 %v41, %v83
  %v113 = vmul.f32 %v42, %v83
  %v114 = vmul.f32 %v43, %v83
  %v115 = vmul.f32 %v44, %v83
  %v116 = vmul.f32 %v45, %v83
  %v117 = vmul.f32 %v46, %v83
  %v118 = vmul.f32 %v47, %v83
  %v119 = vmul.f32 %v48, %v83
  %v120 = vmul.f32 %v49, %v83
  %v121 = vmul.f32 %v50, %v83
  %v122 = vmul.f32 %v51, %v83
  %v123 = vmul.f32 %v52, %v83
  %v124 = vmul.f32 %v53, %v83
  %v125 = vmul.f32 %v54, %v83
  %v126 = vmul.f32 %v55, %v83
  %v127 = vmul.f32 %v56, %v83
  %v128 = vmul.f32 %v57, %v83
  %v129 = vmul.f32 %v58, %v83
  %v130 = vmul.f32 %v59, %v83
  %v131 = vmul.f32 %v60, %v83
  %v132 = vmul.f32 %v61, %v83
  %v133 = vmul.f32 %v62, %v83
  %v134 = vmul.f32 %v63, %v83
  %v135 = vmul.f32 %v64, %v83
  %v136 = vmul.f32 %v65, %v83
  %v137 = vmul.f32 %v66, %v83
  %v138 = vmul.f32 %v67, %v83
  %v139 = vmul.f32 %v68, %v83
  %v140 = vmul.f32 %v69, %v83
  %v141 = vmul.f32 %v70, %v83
  %v142 = vmul.f32 %v71, %v83
  %v143 = vmul.f32 %v72, %v83
  %v144 = vmul.f32 %v73, %v83
  %v145 = vmul.f32 %v74, %v83
  %v146 = vmul.f32 %v75, %v83
  %v147 = vmul.f32 %v76, %v83
  %v148 = vmul.f32 %v77, %v83
  %v149 = vld [vmem:[%s2] sm:$0x1]
  %v151 = vlaneseq
  %v152 = vshrl.u32 %v151, 7
  %v153 = vsub.s32 0, %v152
  %v154 = vrot.slane %v149, %v153
  %v156 = vadd.f32 %v85, %v154
  %v157 = vadd.f32 %v86, %v154
  %v158 = vadd.f32 %v87, %v154
  %v159 = vadd.f32 %v88, %v154
  %v160 = vadd.f32 %v89, %v154
  %v161 = vadd.f32 %v90, %v154
  %v162 = vadd.f32 %v91, %v154
  %v163 = vadd.f32 %v92, %v154
  %v164 = vadd.f32 %v93, %v154
  %v165 = vadd.f32 %v94, %v154
  %v166 = vadd.f32 %v95, %v154
  %v167 = vadd.f32 %v96, %v154
  %v168 = vadd.f32 %v97, %v154
  %v169 = vadd.f32 %v98, %v154
  %v170 = vadd.f32 %v99, %v154
  %v171 = vadd.f32 %v100, %v154
  %v172 = vadd.f32 %v101, %v154
  %v173 = vadd.f32 %v102, %v154
  %v174 = vadd.f32 %v103, %v154
  %v175 = vadd.f32 %v104, %v154
  %v176 = vadd.f32 %v105, %v154
  %v177 = vadd.f32 %v106, %v154
  %v178 = vadd.f32 %v107, %v154
  %v179 = vadd.f32 %v108, %v154
  %v180 = vadd.f32 %v109, %v154
  %v181 = vadd.f32 %v110, %v154
  %v182 = vadd.f32 %v111, %v154
  %v183 = vadd.f32 %v112, %v154
  %v184 = vadd.f32 %v113, %v154
  %v185 = vadd.f32 %v114, %v154
  %v186 = vadd.f32 %v115, %v154
  %v187 = vadd.f32 %v116, %v154
  %v188 = vadd.f32 %v117, %v154
  %v189 = vadd.f32 %v118, %v154
  %v190 = vadd.f32 %v119, %v154
  %v191 = vadd.f32 %v120, %v154
  %v192 = vadd.f32 %v121, %v154
  %v193 = vadd.f32 %v122, %v154
  %v194 = vadd.f32 %v123, %v154
  %v195 = vadd.f32 %v124, %v154
  %v196 = vadd.f32 %v125, %v154
  %v197 = vadd.f32 %v126, %v154
  %v198 = vadd.f32 %v127, %v154
  %v199 = vadd.f32 %v128, %v154
  %v200 = vadd.f32 %v129, %v154
  %v201 = vadd.f32 %v130, %v154
  %v202 = vadd.f32 %v131, %v154
  %v203 = vadd.f32 %v132, %v154
  %v204 = vadd.f32 %v133, %v154
  %v205 = vadd.f32 %v134, %v154
  %v206 = vadd.f32 %v135, %v154
  %v207 = vadd.f32 %v136, %v154
  %v208 = vadd.f32 %v137, %v154
  %v209 = vadd.f32 %v138, %v154
  %v210 = vadd.f32 %v139, %v154
  %v211 = vadd.f32 %v140, %v154
  %v212 = vadd.f32 %v141, %v154
  %v213 = vadd.f32 %v142, %v154
  %v214 = vadd.f32 %v143, %v154
  %v215 = vadd.f32 %v144, %v154
  %v216 = vadd.f32 %v145, %v154
  %v217 = vadd.f32 %v146, %v154
  %v218 = vadd.f32 %v147, %v154
  %v219 = vadd.f32 %v148, %v154
  %vm220 = vcmp.ge.f32.partialorder %v156, 0.0
  %vm221 = vcmp.ge.f32.partialorder %v157, 0.0
  %vm222 = vcmp.ge.f32.partialorder %v158, 0.0
  %vm223 = vcmp.ge.f32.partialorder %v159, 0.0
  %vm224 = vcmp.ge.f32.partialorder %v160, 0.0
  %vm225 = vcmp.ge.f32.partialorder %v161, 0.0
  %vm226 = vcmp.ge.f32.partialorder %v162, 0.0
  %vm227 = vcmp.ge.f32.partialorder %v163, 0.0
  %vm228 = vcmp.ge.f32.partialorder %v164, 0.0
  %vm229 = vcmp.ge.f32.partialorder %v165, 0.0
  %vm230 = vcmp.ge.f32.partialorder %v166, 0.0
  %vm231 = vcmp.ge.f32.partialorder %v167, 0.0
  %vm232 = vcmp.ge.f32.partialorder %v168, 0.0
  %vm233 = vcmp.ge.f32.partialorder %v169, 0.0
  %vm234 = vcmp.ge.f32.partialorder %v170, 0.0
  %vm235 = vcmp.ge.f32.partialorder %v171, 0.0
  %vm236 = vcmp.ge.f32.partialorder %v172, 0.0
  %vm237 = vcmp.ge.f32.partialorder %v173, 0.0
  %vm238 = vcmp.ge.f32.partialorder %v174, 0.0
  %vm239 = vcmp.ge.f32.partialorder %v175, 0.0
  %vm240 = vcmp.ge.f32.partialorder %v176, 0.0
  %vm241 = vcmp.ge.f32.partialorder %v177, 0.0
  %vm242 = vcmp.ge.f32.partialorder %v178, 0.0
  %vm243 = vcmp.ge.f32.partialorder %v179, 0.0
  %vm244 = vcmp.ge.f32.partialorder %v180, 0.0
  %vm245 = vcmp.ge.f32.partialorder %v181, 0.0
  %vm246 = vcmp.ge.f32.partialorder %v182, 0.0
  %vm247 = vcmp.ge.f32.partialorder %v183, 0.0
  %vm248 = vcmp.ge.f32.partialorder %v184, 0.0
  %vm249 = vcmp.ge.f32.partialorder %v185, 0.0
  %vm250 = vcmp.ge.f32.partialorder %v186, 0.0
  %vm251 = vcmp.ge.f32.partialorder %v187, 0.0
  %vm252 = vcmp.ge.f32.partialorder %v188, 0.0
  %vm253 = vcmp.ge.f32.partialorder %v189, 0.0
  %vm254 = vcmp.ge.f32.partialorder %v190, 0.0
  %vm255 = vcmp.ge.f32.partialorder %v191, 0.0
  %vm256 = vcmp.ge.f32.partialorder %v192, 0.0
  %vm257 = vcmp.ge.f32.partialorder %v193, 0.0
  %vm258 = vcmp.ge.f32.partialorder %v194, 0.0
  %vm259 = vcmp.ge.f32.partialorder %v195, 0.0
  %vm260 = vcmp.ge.f32.partialorder %v196, 0.0
  %vm261 = vcmp.ge.f32.partialorder %v197, 0.0
  %vm262 = vcmp.ge.f32.partialorder %v198, 0.0
  %vm263 = vcmp.ge.f32.partialorder %v199, 0.0
  %vm264 = vcmp.ge.f32.partialorder %v200, 0.0
  %vm265 = vcmp.ge.f32.partialorder %v201, 0.0
  %vm266 = vcmp.ge.f32.partialorder %v202, 0.0
  %vm267 = vcmp.ge.f32.partialorder %v203, 0.0
  %vm268 = vcmp.ge.f32.partialorder %v204, 0.0
  %vm269 = vcmp.ge.f32.partialorder %v205, 0.0
  %vm270 = vcmp.ge.f32.partialorder %v206, 0.0
  %vm271 = vcmp.ge.f32.partialorder %v207, 0.0
  %vm272 = vcmp.ge.f32.partialorder %v208, 0.0
  %vm273 = vcmp.ge.f32.partialorder %v209, 0.0
  %vm274 = vcmp.ge.f32.partialorder %v210, 0.0
  %vm275 = vcmp.ge.f32.partialorder %v211, 0.0
  %vm276 = vcmp.ge.f32.partialorder %v212, 0.0
  %vm277 = vcmp.ge.f32.partialorder %v213, 0.0
  %vm278 = vcmp.ge.f32.partialorder %v214, 0.0
  %vm279 = vcmp.ge.f32.partialorder %v215, 0.0
  %vm280 = vcmp.ge.f32.partialorder %v216, 0.0
  %vm281 = vcmp.ge.f32.partialorder %v217, 0.0
  %vm282 = vcmp.ge.f32.partialorder %v218, 0.0
  %vm283 = vcmp.ge.f32.partialorder %v219, 0.0
  %v284 = vmul.f32 %v156, 0.01
  %v285 = vmul.f32 %v157, 0.01
  %v286 = vmul.f32 %v158, 0.01
  %v287 = vmul.f32 %v159, 0.01
  %v288 = vmul.f32 %v160, 0.01
  %v289 = vmul.f32 %v161, 0.01
  %v290 = vmul.f32 %v162, 0.01
  %v291 = vmul.f32 %v163, 0.01
  %v292 = vmul.f32 %v164, 0.01
  %v293 = vmul.f32 %v165, 0.01
  %v294 = vmul.f32 %v166, 0.01
  %v295 = vmul.f32 %v167, 0.01
  %v296 = vmul.f32 %v168, 0.01
  %v297 = vmul.f32 %v169, 0.01
  %v298 = vmul.f32 %v170, 0.01
  %v299 = vmul.f32 %v171, 0.01
  %v300 = vmul.f32 %v172, 0.01
  %v301 = vmul.f32 %v173, 0.01
  %v302 = vmul.f32 %v174, 0.01
  %v303 = vmul.f32 %v175, 0.01
  %v304 = vmul.f32 %v176, 0.01
  %v305 = vmul.f32 %v177, 0.01
  %v306 = vmul.f32 %v178, 0.01
  %v307 = vmul.f32 %v179, 0.01
  %v308 = vmul.f32 %v180, 0.01
  %v309 = vmul.f32 %v181, 0.01
  %v310 = vmul.f32 %v182, 0.01
  %v311 = vmul.f32 %v183, 0.01
  %v312 = vmul.f32 %v184, 0.01
  %v313 = vmul.f32 %v185, 0.01
  %v314 = vmul.f32 %v186, 0.01
  %v315 = vmul.f32 %v187, 0.01
  %v316 = vmul.f32 %v188, 0.01
  %v317 = vmul.f32 %v189, 0.01
  %v318 = vmul.f32 %v190, 0.01
  %v319 = vmul.f32 %v191, 0.01
  %v320 = vmul.f32 %v192, 0.01
  %v321 = vmul.f32 %v193, 0.01
  %v322 = vmul.f32 %v194, 0.01
  %v323 = vmul.f32 %v195, 0.01
  %v324 = vmul.f32 %v196, 0.01
  %v325 = vmul.f32 %v197, 0.01
  %v326 = vmul.f32 %v198, 0.01
  %v327 = vmul.f32 %v199, 0.01
  %v328 = vmul.f32 %v200, 0.01
  %v329 = vmul.f32 %v201, 0.01
  %v330 = vmul.f32 %v202, 0.01
  %v331 = vmul.f32 %v203, 0.01
  %v332 = vmul.f32 %v204, 0.01
  %v333 = vmul.f32 %v205, 0.01
  %v334 = vmul.f32 %v206, 0.01
  %v335 = vmul.f32 %v207, 0.01
  %v336 = vmul.f32 %v208, 0.01
  %v337 = vmul.f32 %v209, 0.01
  %v338 = vmul.f32 %v210, 0.01
  %v339 = vmul.f32 %v211, 0.01
  %v340 = vmul.f32 %v212, 0.01
  %v341 = vmul.f32 %v213, 0.01
  %v342 = vmul.f32 %v214, 0.01
  %v343 = vmul.f32 %v215, 0.01
  %v344 = vmul.f32 %v216, 0.01
  %v345 = vmul.f32 %v217, 0.01
  %v346 = vmul.f32 %v218, 0.01
  %v347 = vmul.f32 %v219, 0.01
  %v348 = vsel %vm220, %v156, %v284
  %v349 = vsel %vm221, %v157, %v285
  %v350 = vsel %vm222, %v158, %v286
  %v351 = vsel %vm223, %v159, %v287
  %v352 = vsel %vm224, %v160, %v288
  %v353 = vsel %vm225, %v161, %v289
  %v354 = vsel %vm226, %v162, %v290
  %v355 = vsel %vm227, %v163, %v291
  %v356 = vsel %vm228, %v164, %v292
  %v357 = vsel %vm229, %v165, %v293
  %v358 = vsel %vm230, %v166, %v294
  %v359 = vsel %vm231, %v167, %v295
  %v360 = vsel %vm232, %v168, %v296
  %v361 = vsel %vm233, %v169, %v297
  %v362 = vsel %vm234, %v170, %v298
  %v363 = vsel %vm235, %v171, %v299
  %v364 = vsel %vm236, %v172, %v300
  %v365 = vsel %vm237, %v173, %v301
  %v366 = vsel %vm238, %v174, %v302
  %v367 = vsel %vm239, %v175, %v303
  %v368 = vsel %vm240, %v176, %v304
  %v369 = vsel %vm241, %v177, %v305
  %v370 = vsel %vm242, %v178, %v306
  %v371 = vsel %vm243, %v179, %v307
  %v372 = vsel %vm244, %v180, %v308
  %v373 = vsel %vm245, %v181, %v309
  %v374 = vsel %vm246, %v182, %v310
  %v375 = vsel %vm247, %v183, %v311
  %v376 = vsel %vm248, %v184, %v312
  %v377 = vsel %vm249, %v185, %v313
  %v378 = vsel %vm250, %v186, %v314
  %v379 = vsel %vm251, %v187, %v315
  %v380 = vsel %vm252, %v188, %v316
  %v381 = vsel %vm253, %v189, %v317
  %v382 = vsel %vm254, %v190, %v318
  %v383 = vsel %vm255, %v191, %v319
  %v384 = vsel %vm256, %v192, %v320
  %v385 = vsel %vm257, %v193, %v321
  %v386 = vsel %vm258, %v194, %v322
  %v387 = vsel %vm259, %v195, %v323
  %v388 = vsel %vm260, %v196, %v324
  %v389 = vsel %vm261, %v197, %v325
  %v390 = vsel %vm262, %v198, %v326
  %v391 = vsel %vm263, %v199, %v327
  %v392 = vsel %vm264, %v200, %v328
  %v393 = vsel %vm265, %v201, %v329
  %v394 = vsel %vm266, %v202, %v330
  %v395 = vsel %vm267, %v203, %v331
  %v396 = vsel %vm268, %v204, %v332
  %v397 = vsel %vm269, %v205, %v333
  %v398 = vsel %vm270, %v206, %v334
  %v399 = vsel %vm271, %v207, %v335
  %v400 = vsel %vm272, %v208, %v336
  %v401 = vsel %vm273, %v209, %v337
  %v402 = vsel %vm274, %v210, %v338
  %v403 = vsel %vm275, %v211, %v339
  %v404 = vsel %vm276, %v212, %v340
  %v405 = vsel %vm277, %v213, %v341
  %v406 = vsel %vm278, %v214, %v342
  %v407 = vsel %vm279, %v215, %v343
  %v408 = vsel %vm280, %v216, %v344
  %v409 = vsel %vm281, %v217, %v345
  %v410 = vsel %vm282, %v218, %v346
  %v411 = vsel %vm283, %v219, %v347
  %v412 = vpack.c.bf16 %v349, %v348
  %v413 = vpack.c.bf16 %v351, %v350
  %v414 = vpack.c.bf16 %v353, %v352
  %v415 = vpack.c.bf16 %v355, %v354
  %v416 = vpack.c.bf16 %v357, %v356
  %v417 = vpack.c.bf16 %v359, %v358
  %v418 = vpack.c.bf16 %v361, %v360
  %v419 = vpack.c.bf16 %v363, %v362
  %v420 = vpack.c.bf16 %v365, %v364
  %v421 = vpack.c.bf16 %v367, %v366
  %v422 = vpack.c.bf16 %v369, %v368
  %v423 = vpack.c.bf16 %v371, %v370
  %v424 = vpack.c.bf16 %v373, %v372
  %v425 = vpack.c.bf16 %v375, %v374
  %v426 = vpack.c.bf16 %v377, %v376
  %v427 = vpack.c.bf16 %v379, %v378
  %v428 = vpack.c.bf16 %v381, %v380
  %v429 = vpack.c.bf16 %v383, %v382
  %v430 = vpack.c.bf16 %v385, %v384
  %v431 = vpack.c.bf16 %v387, %v386
  %v432 = vpack.c.bf16 %v389, %v388
  %v433 = vpack.c.bf16 %v391, %v390
  %v434 = vpack.c.bf16 %v393, %v392
  %v435 = vpack.c.bf16 %v395, %v394
  %v436 = vpack.c.bf16 %v397, %v396
  %v437 = vpack.c.bf16 %v399, %v398
  %v438 = vpack.c.bf16 %v401, %v400
  %v439 = vpack.c.bf16 %v403, %v402
  %v440 = vpack.c.bf16 %v405, %v404
  %v441 = vpack.c.bf16 %v407, %v406
  %v442 = vpack.c.bf16 %v409, %v408
  %v443 = vpack.c.bf16 %v411, %v410
  %v476 = vunpack.c.l.b16 %v412
  %v477 = vunpack.c.h.b16 %v412
  %v478 = vunpack.c.l.b16 %v413
  %v479 = vunpack.c.h.b16 %v413
  %v480 = vunpack.c.l.b16 %v414
  %v481 = vunpack.c.h.b16 %v414
  %v482 = vunpack.c.l.b16 %v415
  %v483 = vunpack.c.h.b16 %v415
  %v484 = vunpack.c.l.b16 %v416
  %v485 = vunpack.c.h.b16 %v416
  %v486 = vunpack.c.l.b16 %v417
  %v487 = vunpack.c.h.b16 %v417
  %v488 = vunpack.c.l.b16 %v418
  %v489 = vunpack.c.h.b16 %v418
  %v490 = vunpack.c.l.b16 %v419
  %v491 = vunpack.c.h.b16 %v419
  %v492 = vunpack.c.l.b16 %v420
  %v493 = vunpack.c.h.b16 %v420
  %v494 = vunpack.c.l.b16 %v421
  %v495 = vunpack.c.h.b16 %v421
  %v496 = vunpack.c.l.b16 %v422
  %v497 = vunpack.c.h.b16 %v422
  %v498 = vunpack.c.l.b16 %v423
  %v499 = vunpack.c.h.b16 %v423
  %v500 = vunpack.c.l.b16 %v424
  %v501 = vunpack.c.h.b16 %v424
  %v502 = vunpack.c.l.b16 %v425
  %v503 = vunpack.c.h.b16 %v425
  %v504 = vunpack.c.l.b16 %v426
  %v505 = vunpack.c.h.b16 %v426
  %v506 = vunpack.c.l.b16 %v427
  %v507 = vunpack.c.h.b16 %v427
  %v508 = vunpack.c.l.b16 %v428
  %v509 = vunpack.c.h.b16 %v428
  %v510 = vunpack.c.l.b16 %v429
  %v511 = vunpack.c.h.b16 %v429
  %v512 = vunpack.c.l.b16 %v430
  %v513 = vunpack.c.h.b16 %v430
  %v514 = vunpack.c.l.b16 %v431
  %v515 = vunpack.c.h.b16 %v431
  %v516 = vunpack.c.l.b16 %v432
  %v517 = vunpack.c.h.b16 %v432
  %v518 = vunpack.c.l.b16 %v433
  %v519 = vunpack.c.h.b16 %v433
  %v520 = vunpack.c.l.b16 %v434
  %v521 = vunpack.c.h.b16 %v434
  %v522 = vunpack.c.l.b16 %v435
  %v523 = vunpack.c.h.b16 %v435
  %v524 = vunpack.c.l.b16 %v436
  %v525 = vunpack.c.h.b16 %v436
  %v526 = vunpack.c.l.b16 %v437
  %v527 = vunpack.c.h.b16 %v437
  %v528 = vunpack.c.l.b16 %v438
  %v529 = vunpack.c.h.b16 %v438
  %v530 = vunpack.c.l.b16 %v439
  %v531 = vunpack.c.h.b16 %v439
  %v532 = vunpack.c.l.b16 %v440
  %v533 = vunpack.c.h.b16 %v440
  %v534 = vunpack.c.l.b16 %v441
  %v535 = vunpack.c.h.b16 %v441
  %v536 = vunpack.c.l.b16 %v442
  %v537 = vunpack.c.h.b16 %v442
  %v538 = vunpack.c.l.b16 %v443
  %v539 = vunpack.c.h.b16 %v443
  %v540 = vpack.c.b16 %v476, %v476
  %v541 = vpack.c.b16 %v477, %v477
  %v542 = vpack.c.b16 %v478, %v478
  %v543 = vpack.c.b16 %v479, %v479
  %v544 = vpack.c.b16 %v480, %v480
  %v545 = vpack.c.b16 %v481, %v481
  %v546 = vpack.c.b16 %v482, %v482
  %v547 = vpack.c.b16 %v483, %v483
  %v548 = vpack.c.b16 %v484, %v484
  %v549 = vpack.c.b16 %v485, %v485
  %v550 = vpack.c.b16 %v486, %v486
  %v551 = vpack.c.b16 %v487, %v487
  %v552 = vpack.c.b16 %v488, %v488
  %v553 = vpack.c.b16 %v489, %v489
  %v554 = vpack.c.b16 %v490, %v490
  %v555 = vpack.c.b16 %v491, %v491
  %v556 = vpack.c.b16 %v492, %v492
  %v557 = vpack.c.b16 %v493, %v493
  %v558 = vpack.c.b16 %v494, %v494
  %v559 = vpack.c.b16 %v495, %v495
  %v560 = vpack.c.b16 %v496, %v496
  %v561 = vpack.c.b16 %v497, %v497
  %v562 = vpack.c.b16 %v498, %v498
  %v563 = vpack.c.b16 %v499, %v499
  %v564 = vpack.c.b16 %v500, %v500
  %v565 = vpack.c.b16 %v501, %v501
  %v566 = vpack.c.b16 %v502, %v502
  %v567 = vpack.c.b16 %v503, %v503
  %v568 = vpack.c.b16 %v504, %v504
  %v569 = vpack.c.b16 %v505, %v505
  %v570 = vpack.c.b16 %v506, %v506
  %v571 = vpack.c.b16 %v507, %v507
  %v572 = vpack.c.b16 %v508, %v508
  %v573 = vpack.c.b16 %v509, %v509
  %v574 = vpack.c.b16 %v510, %v510
  %v575 = vpack.c.b16 %v511, %v511
  %v576 = vpack.c.b16 %v512, %v512
  %v577 = vpack.c.b16 %v513, %v513
  %v578 = vpack.c.b16 %v514, %v514
  %v579 = vpack.c.b16 %v515, %v515
  %v580 = vpack.c.b16 %v516, %v516
  %v581 = vpack.c.b16 %v517, %v517
  %v582 = vpack.c.b16 %v518, %v518
  %v583 = vpack.c.b16 %v519, %v519
  %v584 = vpack.c.b16 %v520, %v520
  %v585 = vpack.c.b16 %v521, %v521
  %v586 = vpack.c.b16 %v522, %v522
  %v587 = vpack.c.b16 %v523, %v523
  %v588 = vpack.c.b16 %v524, %v524
  %v589 = vpack.c.b16 %v525, %v525
  %v590 = vpack.c.b16 %v526, %v526
  %v591 = vpack.c.b16 %v527, %v527
  %v592 = vpack.c.b16 %v528, %v528
  %v593 = vpack.c.b16 %v529, %v529
  %v594 = vpack.c.b16 %v530, %v530
  %v595 = vpack.c.b16 %v531, %v531
  %v596 = vpack.c.b16 %v532, %v532
  %v597 = vpack.c.b16 %v533, %v533
  %v598 = vpack.c.b16 %v534, %v534
  %v599 = vpack.c.b16 %v535, %v535
  %v600 = vpack.c.b16 %v536, %v536
  %v601 = vpack.c.b16 %v537, %v537
  %v602 = vpack.c.b16 %v538, %v538
  %v603 = vpack.c.b16 %v539, %v539
  %668 = vst [vmem:[%s3] sm:$0xf] %v540
  %669 = vst [vmem:[%s3 + $0x4] sm:$0xf] %v541
  %670 = vst [vmem:[%s3 + $0x8] sm:$0xf] %v542
  %671 = vst [vmem:[%s3 + $0xc] sm:$0xf] %v543
  %672 = vst [vmem:[%s3 + $0x10] sm:$0xf] %v544
  %673 = vst [vmem:[%s3 + $0x14] sm:$0xf] %v545
  %674 = vst [vmem:[%s3 + $0x18] sm:$0xf] %v546
  %675 = vst [vmem:[%s3 + $0x1c] sm:$0xf] %v547
  %676 = vst [vmem:[%s3 + $0x20] sm:$0xf] %v548
  %677 = vst [vmem:[%s3 + $0x24] sm:$0xf] %v549
  %678 = vst [vmem:[%s3 + $0x28] sm:$0xf] %v550
  %679 = vst [vmem:[%s3 + $0x2c] sm:$0xf] %v551
  %680 = vst [vmem:[%s3 + $0x30] sm:$0xf] %v552
  %681 = vst [vmem:[%s3 + $0x34] sm:$0xf] %v553
  %682 = vst [vmem:[%s3 + $0x38] sm:$0xf] %v554
  %683 = vst [vmem:[%s3 + $0x3c] sm:$0xf] %v555
  %684 = vst [vmem:[%s3 + $0x40] sm:$0xf] %v556
  %685 = vst [vmem:[%s3 + $0x44] sm:$0xf] %v557
  %686 = vst [vmem:[%s3 + $0x48] sm:$0xf] %v558
  %687 = vst [vmem:[%s3 + $0x4c] sm:$0xf] %v559
  %688 = vst [vmem:[%s3 + $0x50] sm:$0xf] %v560
  %689 = vst [vmem:[%s3 + $0x54] sm:$0xf] %v561
  %690 = vst [vmem:[%s3 + $0x58] sm:$0xf] %v562
  %691 = vst [vmem:[%s3 + $0x5c] sm:$0xf] %v563
  %692 = vst [vmem:[%s3 + $0x60] sm:$0xf] %v564
  %693 = vst [vmem:[%s3 + $0x64] sm:$0xf] %v565
  %694 = vst [vmem:[%s3 + $0x68] sm:$0xf] %v566
  %695 = vst [vmem:[%s3 + $0x6c] sm:$0xf] %v567
  %696 = vst [vmem:[%s3 + $0x70] sm:$0xf] %v568
  %697 = vst [vmem:[%s3 + $0x74] sm:$0xf] %v569
  %698 = vst [vmem:[%s3 + $0x78] sm:$0xf] %v570
  %699 = vst [vmem:[%s3 + $0x7c] sm:$0xf] %v571
  %700 = vst [vmem:[%s3 + $0x80] sm:$0xf] %v572
  %701 = vst [vmem:[%s3 + $0x84] sm:$0xf] %v573
  %702 = vst [vmem:[%s3 + $0x88] sm:$0xf] %v574
  %703 = vst [vmem:[%s3 + $0x8c] sm:$0xf] %v575
  %704 = vst [vmem:[%s3 + $0x90] sm:$0xf] %v576
  %705 = vst [vmem:[%s3 + $0x94] sm:$0xf] %v577
  %706 = vst [vmem:[%s3 + $0x98] sm:$0xf] %v578
  %707 = vst [vmem:[%s3 + $0x9c] sm:$0xf] %v579
  %708 = vst [vmem:[%s3 + $0xa0] sm:$0xf] %v580
  %709 = vst [vmem:[%s3 + $0xa4] sm:$0xf] %v581
  %710 = vst [vmem:[%s3 + $0xa8] sm:$0xf] %v582
  %711 = vst [vmem:[%s3 + $0xac] sm:$0xf] %v583
  %712 = vst [vmem:[%s3 + $0xb0] sm:$0xf] %v584
  %713 = vst [vmem:[%s3 + $0xb4] sm:$0xf] %v585
  %714 = vst [vmem:[%s3 + $0xb8] sm:$0xf] %v586
  %715 = vst [vmem:[%s3 + $0xbc] sm:$0xf] %v587
  %716 = vst [vmem:[%s3 + $0xc0] sm:$0xf] %v588
  %717 = vst [vmem:[%s3 + $0xc4] sm:$0xf] %v589
  %718 = vst [vmem:[%s3 + $0xc8] sm:$0xf] %v590
  %719 = vst [vmem:[%s3 + $0xcc] sm:$0xf] %v591
  %720 = vst [vmem:[%s3 + $0xd0] sm:$0xf] %v592
  %721 = vst [vmem:[%s3 + $0xd4] sm:$0xf] %v593
  %722 = vst [vmem:[%s3 + $0xd8] sm:$0xf] %v594
  %723 = vst [vmem:[%s3 + $0xdc] sm:$0xf] %v595
  %724 = vst [vmem:[%s3 + $0xe0] sm:$0xf] %v596
  %725 = vst [vmem:[%s3 + $0xe4] sm:$0xf] %v597
  %726 = vst [vmem:[%s3 + $0xe8] sm:$0xf] %v598
  %727 = vst [vmem:[%s3 + $0xec] sm:$0xf] %v599
  %728 = vst [vmem:[%s3 + $0xf0] sm:$0xf] %v600
  %729 = vst [vmem:[%s3 + $0xf4] sm:$0xf] %v601
  %730 = vst [vmem:[%s3 + $0xf8] sm:$0xf] %v602
  %731 = vst [vmem:[%s3 + $0xfc] sm:$0xf] %v603
  // Predicated region
  $region14: #{discrim_block_forward.5} parent=0 // pred_check
    _
  $region15: #{discrim_block_forward.5} parent=0 // pred_check_branch
    %733 = sbr.rel (0) target = $region17
  $region16: #{discrim_block_forward.5} parent=0 // pred_region
    _
  $region17: #{discrim_block_forward.5} parent=0 // pred_fallthru
    _
  // Predicated region
  $region18: #{discrim_block_forward.5} parent=0 // pred_check
    _
  $region19: #{discrim_block_forward.5} parent=0 // pred_check_branch
    %735 = sbr.rel (0) target = $region21
  $region20: #{discrim_block_forward.5} parent=0 // pred_region
    _
  $region21: #{discrim_block_forward.5} parent=0 // pred_fallthru
    _

// kernel: discrim_block_forward.4
$region0: #{discrim_block_forward.4}
  #allocation0 [shape = 'u32[]', space=smem, size = 0x4, offset = 0x4, fixed_abs, tag = 'smem constant byte address 0x4 - core index']
  #allocation1 [shape = 'u32[144,128]{1,0:T(1,128)}', space=vmem, size = 0x12000, scoped, tag = 'internal scratch']
  %s0 = inlined_call_operand.vmem [shape: bf16[512,36], index: 0, kind: input, shape index: {}]
  %s1 = inlined_call_operand.vmem [shape: bf16[36,128], index: 1, kind: input, shape index: {}]
  %s2 = inlined_call_operand.vmem [shape: f32[512,128], index: 2, kind: output, shape index: {0}]
  %s3 = inlined_call_operand.vmem [shape: f32[1,8,128], index: 3, kind: output, shape index: {1}]
  %4 = xla_tuple %s2, %s3
  %s5 = sld [smem:[#allocation0]]
  $region26: #{discrim_block_forward.4} parent=0
    _
  %s7 = ssub.s32 1, %s5
  %s8 = scalar_select 0, %s7, %s5
  // Predicated region
  $region2: #{discrim_block_forward.4} parent=0 // pred_check
    _
  $region3: #{discrim_block_forward.4} parent=0 // pred_check_branch
    %10 = sbr.rel (0) target = $region5
  $region4: #{discrim_block_forward.4} parent=0 // pred_region
    _
  $region5: #{discrim_block_forward.4} parent=0 // pred_fallthru
    _
  // Predicated region
  $region6: #{discrim_block_forward.4} parent=0 // pred_check
    _
  $region7: #{discrim_block_forward.4} parent=0 // pred_check_branch
    %12 = sbr.rel (0) target = $region9
  $region8: #{discrim_block_forward.4} parent=0 // pred_region
    _
  $region9: #{discrim_block_forward.4} parent=0 // pred_fallthru
    _
  %v14 = vld [vmem:[%s0] sm:$0xf]
  %v15 = vld [vmem:[%s0 + $0x4] sm:$0xf]
  %v16 = vld [vmem:[%s0 + $0x8] sm:$0xf]
  %v17 = vld [vmem:[%s0 + $0xc] sm:$0xf]
  %v18 = vld [vmem:[%s0 + $0x10] sm:$0xf]
  %v19 = vld [vmem:[%s0 + $0x14] sm:$0xf]
  %v20 = vld [vmem:[%s0 + $0x18] sm:$0xf]
  %v21 = vld [vmem:[%s0 + $0x1c] sm:$0xf]
  %v22 = vld [vmem:[%s0 + $0x20] sm:$0xf]
  %v23 = vld [vmem:[%s0 + $0x24] sm:$0xf]
  %v24 = vld [vmem:[%s0 + $0x28] sm:$0xf]
  %v25 = vld [vmem:[%s0 + $0x2c] sm:$0xf]
  %v26 = vld [vmem:[%s0 + $0x30] sm:$0xf]
  %v27 = vld [vmem:[%s0 + $0x34] sm:$0xf]
  %v28 = vld [vmem:[%s0 + $0x38] sm:$0xf]
  %v29 = vld [vmem:[%s0 + $0x3c] sm:$0xf]
  %v30 = vld [vmem:[%s0 + $0x40] sm:$0xf]
  %v31 = vld [vmem:[%s0 + $0x44] sm:$0xf]
  %v32 = vld [vmem:[%s0 + $0x48] sm:$0xf]
  %v33 = vld [vmem:[%s0 + $0x4c] sm:$0xf]
  %v34 = vld [vmem:[%s0 + $0x50] sm:$0xf]
  %v35 = vld [vmem:[%s0 + $0x54] sm:$0xf]
  %v36 = vld [vmem:[%s0 + $0x58] sm:$0xf]
  %v37 = vld [vmem:[%s0 + $0x5c] sm:$0xf]
  %v38 = vld [vmem:[%s0 + $0x60] sm:$0xf]
  %v39 = vld [vmem:[%s0 + $0x64] sm:$0xf]
  %v40 = vld [vmem:[%s0 + $0x68] sm:$0xf]
  %v41 = vld [vmem:[%s0 + $0x6c] sm:$0xf]
  %v42 = vld [vmem:[%s0 + $0x70] sm:$0xf]
  %v43 = vld [vmem:[%s0 + $0x74] sm:$0xf]
  %v44 = vld [vmem:[%s0 + $0x78] sm:$0xf]
  %v45 = vld [vmem:[%s0 + $0x7c] sm:$0xf]
  %v46 = vld [vmem:[%s0 + $0x80] sm:$0xf]
  %v47 = vld [vmem:[%s0 + $0x84] sm:$0xf]
  %v48 = vld [vmem:[%s0 + $0x88] sm:$0xf]
  %v49 = vld [vmem:[%s0 + $0x8c] sm:$0xf]
  %v50 = vld [vmem:[%s0 + $0x90] sm:$0xf]
  %v51 = vld [vmem:[%s0 + $0x94] sm:$0xf]
  %v52 = vld [vmem:[%s0 + $0x98] sm:$0xf]
  %v53 = vld [vmem:[%s0 + $0x9c] sm:$0xf]
  %v54 = vld [vmem:[%s0 + $0xa0] sm:$0xf]
  %v55 = vld [vmem:[%s0 + $0xa4] sm:$0xf]
  %v56 = vld [vmem:[%s0 + $0xa8] sm:$0xf]
  %v57 = vld [vmem:[%s0 + $0xac] sm:$0xf]
  %v58 = vld [vmem:[%s0 + $0xb0] sm:$0xf]
  %v59 = vld [vmem:[%s0 + $0xb4] sm:$0xf]
  %v60 = vld [vmem:[%s0 + $0xb8] sm:$0xf]
  %v61 = vld [vmem:[%s0 + $0xbc] sm:$0xf]
  %v62 = vld [vmem:[%s0 + $0xc0] sm:$0xf]
  %v63 = vld [vmem:[%s0 + $0xc4] sm:$0xf]
  %v64 = vld [vmem:[%s0 + $0xc8] sm:$0xf]
  %v65 = vld [vmem:[%s0 + $0xcc] sm:$0xf]
  %v66 = vld [vmem:[%s0 + $0xd0] sm:$0xf]
  %v67 = vld [vmem:[%s0 + $0xd4] sm:$0xf]
  %v68 = vld [vmem:[%s0 + $0xd8] sm:$0xf]
  %v69 = vld [vmem:[%s0 + $0xdc] sm:$0xf]
  %v70 = vld [vmem:[%s0 + $0xe0] sm:$0xf]
  %v71 = vld [vmem:[%s0 + $0xe4] sm:$0xf]
  %v72 = vld [vmem:[%s0 + $0xe8] sm:$0xf]
  %v73 = vld [vmem:[%s0 + $0xec] sm:$0xf]
  %v74 = vld [vmem:[%s0 + $0xf0] sm:$0xf]
  %v75 = vld [vmem:[%s0 + $0xf4] sm:$0xf]
  %v76 = vld [vmem:[%s0 + $0xf8] sm:$0xf]
  %v77 = vld [vmem:[%s0 + $0xfc] sm:$0xf]
  %v78 = vld [vmem:[%s1] sm:$0xf]
  %v79 = vld [vmem:[%s1 + $0x4] sm:$0xf]
  %v80 = vld [vmem:[%s1 + $0x8] sm:$0xf]
  %v81 = vld [vmem:[%s1 + $0xc] sm:$0xf]
  %v82 = vld [vmem:[%s1 + $0x10] sm:$0x3]
  %v147 = vunpack.c.l.b16 %v14
  %v148 = vunpack.c.l.b16 %v15
  %v149 = vunpack.c.l.b16 %v16
  %v150 = vunpack.c.l.b16 %v17
  %v151 = vunpack.c.l.b16 %v18
  %v152 = vunpack.c.l.b16 %v19
  %v153 = vunpack.c.l.b16 %v20
  %v154 = vunpack.c.l.b16 %v21
  %v155 = vunpack.c.l.b16 %v22
  %v156 = vunpack.c.l.b16 %v23
  %v157 = vunpack.c.l.b16 %v24
  %v158 = vunpack.c.l.b16 %v25
  %v159 = vunpack.c.l.b16 %v26
  %v160 = vunpack.c.l.b16 %v27
  %v161 = vunpack.c.l.b16 %v28
  %v162 = vunpack.c.l.b16 %v29
  %v163 = vunpack.c.l.b16 %v30
  %v164 = vunpack.c.l.b16 %v31
  %v165 = vunpack.c.l.b16 %v32
  %v166 = vunpack.c.l.b16 %v33
  %v167 = vunpack.c.l.b16 %v34
  %v168 = vunpack.c.l.b16 %v35
  %v169 = vunpack.c.l.b16 %v36
  %v170 = vunpack.c.l.b16 %v37
  %v171 = vunpack.c.l.b16 %v38
  %v172 = vunpack.c.l.b16 %v39
  %v173 = vunpack.c.l.b16 %v40
  %v174 = vunpack.c.l.b16 %v41
  %v175 = vunpack.c.l.b16 %v42
  %v176 = vunpack.c.l.b16 %v43
  %v177 = vunpack.c.l.b16 %v44
  %v178 = vunpack.c.l.b16 %v45
  %v179 = vunpack.c.l.b16 %v46
  %v180 = vunpack.c.l.b16 %v47
  %v181 = vunpack.c.l.b16 %v48
  %v182 = vunpack.c.l.b16 %v49
  %v183 = vunpack.c.l.b16 %v50
  %v184 = vunpack.c.l.b16 %v51
  %v185 = vunpack.c.l.b16 %v52
  %v186 = vunpack.c.l.b16 %v53
  %v187 = vunpack.c.l.b16 %v54
  %v188 = vunpack.c.l.b16 %v55
  %v189 = vunpack.c.l.b16 %v56
  %v190 = vunpack.c.l.b16 %v57
  %v191 = vunpack.c.l.b16 %v58
  %v192 = vunpack.c.l.b16 %v59
  %v193 = vunpack.c.l.b16 %v60
  %v194 = vunpack.c.l.b16 %v61
  %v195 = vunpack.c.l.b16 %v62
  %v196 = vunpack.c.l.b16 %v63
  %v197 = vunpack.c.l.b16 %v64
  %v198 = vunpack.c.l.b16 %v65
  %v199 = vunpack.c.l.b16 %v66
  %v200 = vunpack.c.l.b16 %v67
  %v201 = vunpack.c.l.b16 %v68
  %v202 = vunpack.c.l.b16 %v69
  %v203 = vunpack.c.l.b16 %v70
  %v204 = vunpack.c.l.b16 %v71
  %v205 = vunpack.c.l.b16 %v72
  %v206 = vunpack.c.l.b16 %v73
  %v207 = vunpack.c.l.b16 %v74
  %v208 = vunpack.c.l.b16 %v75
  %v209 = vunpack.c.l.b16 %v76
  %v210 = vunpack.c.l.b16 %v77
  %v211 = vpack.c.b16 %v148, %v147
  %v212 = vpack.c.b16 %v150, %v149
  %v213 = vpack.c.b16 %v152, %v151
  %v214 = vpack.c.b16 %v154, %v153
  %v215 = vpack.c.b16 %v156, %v155
  %v216 = vpack.c.b16 %v158, %v157
  %v217 = vpack.c.b16 %v160, %v159
  %v218 = vpack.c.b16 %v162, %v161
  %v219 = vpack.c.b16 %v164, %v163
  %v220 = vpack.c.b16 %v166, %v165
  %v221 = vpack.c.b16 %v168, %v167
  %v222 = vpack.c.b16 %v170, %v169
  %v223 = vpack.c.b16 %v172, %v171
  %v224 = vpack.c.b16 %v174, %v173
  %v225 = vpack.c.b16 %v176, %v175
  %v226 = vpack.c.b16 %v178, %v177
  %v227 = vpack.c.b16 %v180, %v179
  %v228 = vpack.c.b16 %v182, %v181
  %v229 = vpack.c.b16 %v184, %v183
  %v230 = vpack.c.b16 %v186, %v185
  %v231 = vpack.c.b16 %v188, %v187
  %v232 = vpack.c.b16 %v190, %v189
  %v233 = vpack.c.b16 %v192, %v191
  %v234 = vpack.c.b16 %v194, %v193
  %v235 = vpack.c.b16 %v196, %v195
  %v236 = vpack.c.b16 %v198, %v197
  %v237 = vpack.c.b16 %v200, %v199
  %v238 = vpack.c.b16 %v202, %v201
  %v239 = vpack.c.b16 %v204, %v203
  %v240 = vpack.c.b16 %v206, %v205
  %v241 = vpack.c.b16 %v208, %v207
  %v242 = vpack.c.b16 %v210, %v209
  %v248 = vunpack.c.l.b16 %v78
  %v249 = vunpack.c.l.b16 %v79
  %v250 = vunpack.c.l.b16 %v80
  %v251 = vunpack.c.l.b16 %v81
  %v252 = vunpack.c.l.b16 %v82
  %v253 = vpack.c.b16 %v249, %v248
  %v254 = vpack.c.b16 %v251, %v250
  %v255 = vpack.c.b16 %v252, %v252
  %vm258 = vcmask 293888
  %v260 = vsel %vm258, %v211, 0
  %v263 = vsel %vm258, %v212, 0
  %v266 = vsel %vm258, %v213, 0
  %v269 = vsel %vm258, %v214, 0
  %v272 = vsel %vm258, %v215, 0
  %v275 = vsel %vm258, %v216, 0
  %v278 = vsel %vm258, %v217, 0
  %v281 = vsel %vm258, %v218, 0
  %v284 = vsel %vm258, %v219, 0
  %v287 = vsel %vm258, %v220, 0
  %v290 = vsel %vm258, %v221, 0
  %v293 = vsel %vm258, %v222, 0
  %v296 = vsel %vm258, %v223, 0
  %v299 = vsel %vm258, %v224, 0
  %v302 = vsel %vm258, %v225, 0
  %v305 = vsel %vm258, %v226, 0
  %v308 = vsel %vm258, %v227, 0
  %v311 = vsel %vm258, %v228, 0
  %v314 = vsel %vm258, %v229, 0
  %v317 = vsel %vm258, %v230, 0
  %v320 = vsel %vm258, %v231, 0
  %v323 = vsel %vm258, %v232, 0
  %v326 = vsel %vm258, %v233, 0
  %v329 = vsel %vm258, %v234, 0
  %v332 = vsel %vm258, %v235, 0
  %v335 = vsel %vm258, %v236, 0
  %v338 = vsel %vm258, %v237, 0
  %v341 = vsel %vm258, %v238, 0
  %v344 = vsel %vm258, %v239, 0
  %v347 = vsel %vm258, %v240, 0
  %v350 = vsel %vm258, %v241, 0
  %v353 = vsel %vm258, %v242, 0
  %vm355 = vcmask 1041408
  %v357 = vsel %vm355, %v255, 0
  %359 = vmatprep.subr.bf16.mxu0 0
  %360 = vmatpush1.bf16.msra.mxu0 0
  %361 = vmatprep.subr.bf16.mxu0 0
  %362 = vmatpush1.bf16.msra.mxu0 0
  %363 = vmatprep.subr.bf16.mxu0 0
  %364 = vmatpush1.bf16.msra.mxu0 0
  %365 = vmatprep.subr.bf16.mxu0 0
  %366 = vmatpush1.bf16.msra.mxu0 0
  %367 = vmatprep.subr.bf16.mxu0 0
  %368 = vmatpush1.bf16.msra.mxu0 0
  %369 = vmatprep.subr.bf16.mxu0 0
  %370 = vmatpush1.bf16.msra.mxu0 %v357
  %371 = vmatprep.subr.bf16.mxu0 0
  %372 = vmatpush1.bf16.msra.mxu0 %v254
  %373 = vmatprep.subr.bf16.mxu0 0
  %374 = vmatpush1.bf16.msra.mxu0 %v253
  %375 = vmatprep.subr.bf16.mxu0 0
  %376 = vmatpush2.bf16.msra.mxu0 0
  %377 = vmatprep.subr.bf16.mxu0 0
  %378 = vmatpush2.bf16.msra.mxu0 0
  %379 = vmatprep.subr.bf16.mxu0 0
  %380 = vmatpush2.bf16.msra.mxu0 0
  %381 = vmatprep.subr.bf16.mxu0 0
  %382 = vmatpush2.bf16.msra.mxu0 0
  %383 = vmatprep.subr.bf16.mxu0 0
  %384 = vmatpush2.bf16.msra.mxu0 0
  %385 = vmatprep.subr.bf16.mxu0 0
  %386 = vmatpush2.bf16.msra.mxu0 0
  %387 = vmatprep.subr.bf16.mxu0 0
  %388 = vmatpush2.bf16.msra.mxu0 0
  %389 = vmatprep.subr.bf16.mxu0 0
  %390 = vmatpush2.bf16.msra.mxu0 0
  %391 = vmatprep.mubr.bf16.mxu0 0
  %392 = vmatmul.mubr.bf16.gmra.mxu0 %v260
  %v393 = vpop.f32.mrf.mxu0
  %v394 = vadd.f32 0.0, %v393
  %v395 = vpop.f32.mrf.mxu0
  %v396 = vpop.f32.mrf.mxu0
  %v397 = vadd.f32 0.0, %v396
  %v398 = vpop.f32.mrf.mxu0
  %399 = vmatprep.mubr.bf16.mxu0 0
  %400 = vmatmul.mubr.bf16.gmra.mxu0 %v263
  %v401 = vpop.f32.mrf.mxu0
  %v402 = vadd.f32 0.0, %v401
  %v403 = vpop.f32.mrf.mxu0
  %v404 = vpop.f32.mrf.mxu0
  %v405 = vadd.f32 0.0, %v404
  %v406 = vpop.f32.mrf.mxu0
  %407 = vmatprep.mubr.bf16.mxu0 0
  %408 = vmatmul.mubr.bf16.gmra.mxu0 %v266
  %v409 = vpop.f32.mrf.mxu0
  %v410 = vadd.f32 0.0, %v409
  %v411 = vpop.f32.mrf.mxu0
  %v412 = vpop.f32.mrf.mxu0
  %v413 = vadd.f32 0.0, %v412
  %v414 = vpop.f32.mrf.mxu0
  %415 = vmatprep.mubr.bf16.mxu0 0
  %416 = vmatmul.mubr.bf16.gmra.mxu0 %v269
  %v417 = vpop.f32.mrf.mxu0
  %v418 = vadd.f32 0.0, %v417
  %v419 = vpop.f32.mrf.mxu0
  %v420 = vpop.f32.mrf.mxu0
  %v421 = vadd.f32 0.0, %v420
  %v422 = vpop.f32.mrf.mxu0
  %423 = vmatprep.mubr.bf16.mxu0 0
  %424 = vmatmul.mubr.bf16.gmra.mxu0 %v272
  %v425 = vpop.f32.mrf.mxu0
  %v426 = vadd.f32 0.0, %v425
  %v427 = vpop.f32.mrf.mxu0
  %v428 = vpop.f32.mrf.mxu0
  %v429 = vadd.f32 0.0, %v428
  %v430 = vpop.f32.mrf.mxu0
  %431 = vmatprep.mubr.bf16.mxu0 0
  %432 = vmatmul.mubr.bf16.gmra.mxu0 %v275
  %v433 = vpop.f32.mrf.mxu0
  %v434 = vadd.f32 0.0, %v433
  %v435 = vpop.f32.mrf.mxu0
  %v436 = vpop.f32.mrf.mxu0
  %v437 = vadd.f32 0.0, %v436
  %v438 = vpop.f32.mrf.mxu0
  %439 = vmatprep.mubr.bf16.mxu0 0
  %440 = vmatmul.mubr.bf16.gmra.mxu0 %v278
  %v441 = vpop.f32.mrf.mxu0
  %v442 = vadd.f32 0.0, %v441
  %v443 = vpop.f32.mrf.mxu0
  %v444 = vpop.f32.mrf.mxu0
  %v445 = vadd.f32 0.0, %v444
  %v446 = vpop.f32.mrf.mxu0
  %447 = vmatprep.mubr.bf16.mxu0 0
  %448 = vmatmul.mubr.bf16.gmra.mxu0 %v281
  %v449 = vpop.f32.mrf.mxu0
  %v450 = vadd.f32 0.0, %v449
  %v451 = vpop.f32.mrf.mxu0
  %v452 = vpop.f32.mrf.mxu0
  %v453 = vadd.f32 0.0, %v452
  %v454 = vpop.f32.mrf.mxu0
  %455 = vmatprep.mubr.bf16.mxu0 0
  %456 = vmatmul.mubr.bf16.gmra.mxu0 %v284
  %v457 = vpop.f32.mrf.mxu0
  %v458 = vadd.f32 0.0, %v457
  %v459 = vpop.f32.mrf.mxu0
  %v460 = vpop.f32.mrf.mxu0
  %v461 = vadd.f32 0.0, %v460
  %v462 = vpop.f32.mrf.mxu0
  %463 = vmatprep.mubr.bf16.mxu0 0
  %464 = vmatmul.mubr.bf16.gmra.mxu0 %v287
  %v465 = vpop.f32.mrf.mxu0
  %v466 = vadd.f32 0.0, %v465
  %v467 = vpop.f32.mrf.mxu0
  %v468 = vpop.f32.mrf.mxu0
  %v469 = vadd.f32 0.0, %v468
  %v470 = vpop.f32.mrf.mxu0
  %471 = vmatprep.mubr.bf16.mxu0 0
  %472 = vmatmul.mubr.bf16.gmra.mxu0 %v290
  %v473 = vpop.f32.mrf.mxu0
  %v474 = vadd.f32 0.0, %v473
  %v475 = vpop.f32.mrf.mxu0
  %v476 = vpop.f32.mrf.mxu0
  %v477 = vadd.f32 0.0, %v476
  %v478 = vpop.f32.mrf.mxu0
  %479 = vmatprep.mubr.bf16.mxu0 0
  %480 = vmatmul.mubr.bf16.gmra.mxu0 %v293
  %v481 = vpop.f32.mrf.mxu0
  %v482 = vadd.f32 0.0, %v481
  %v483 = vpop.f32.mrf.mxu0
  %v484 = vpop.f32.mrf.mxu0
  %v485 = vadd.f32 0.0, %v484
  %v486 = vpop.f32.mrf.mxu0
  %487 = vmatprep.mubr.bf16.mxu0 0
  %488 = vmatmul.mubr.bf16.gmra.mxu0 %v296
  %v489 = vpop.f32.mrf.mxu0
  %v490 = vadd.f32 0.0, %v489
  %v491 = vpop.f32.mrf.mxu0
  %v492 = vpop.f32.mrf.mxu0
  %v493 = vadd.f32 0.0, %v492
  %v494 = vpop.f32.mrf.mxu0
  %495 = vmatprep.mubr.bf16.mxu0 0
  %496 = vmatmul.mubr.bf16.gmra.mxu0 %v299
  %v497 = vpop.f32.mrf.mxu0
  %v498 = vadd.f32 0.0, %v497
  %v499 = vpop.f32.mrf.mxu0
  %v500 = vpop.f32.mrf.mxu0
  %v501 = vadd.f32 0.0, %v500
  %v502 = vpop.f32.mrf.mxu0
  %503 = vmatprep.mubr.bf16.mxu0 0
  %504 = vmatmul.mubr.bf16.gmra.mxu0 %v302
  %v505 = vpop.f32.mrf.mxu0
  %v506 = vadd.f32 0.0, %v505
  %v507 = vpop.f32.mrf.mxu0
  %v508 = vpop.f32.mrf.mxu0
  %v509 = vadd.f32 0.0, %v508
  %v510 = vpop.f32.mrf.mxu0
  %511 = vmatprep.mubr.bf16.mxu0 0
  %512 = vmatmul.mubr.bf16.gmra.mxu0 %v305
  %v513 = vpop.f32.mrf.mxu0
  %v514 = vadd.f32 0.0, %v513
  %v515 = vpop.f32.mrf.mxu0
  %v516 = vpop.f32.mrf.mxu0
  %v517 = vadd.f32 0.0, %v516
  %v518 = vpop.f32.mrf.mxu0
  %519 = vmatprep.mubr.bf16.mxu0 0
  %520 = vmatmul.mubr.bf16.gmra.mxu0 %v308
  %v521 = vpop.f32.mrf.mxu0
  %v522 = vadd.f32 0.0, %v521
  %v523 = vpop.f32.mrf.mxu0
  %v524 = vpop.f32.mrf.mxu0
  %v525 = vadd.f32 0.0, %v524
  %v526 = vpop.f32.mrf.mxu0
  %527 = vmatprep.mubr.bf16.mxu0 0
  %528 = vmatmul.mubr.bf16.gmra.mxu0 %v311
  %v529 = vpop.f32.mrf.mxu0
  %v530 = vadd.f32 0.0, %v529
  %v531 = vpop.f32.mrf.mxu0
  %v532 = vpop.f32.mrf.mxu0
  %v533 = vadd.f32 0.0, %v532
  %v534 = vpop.f32.mrf.mxu0
  %535 = vmatprep.mubr.bf16.mxu0 0
  %536 = vmatmul.mubr.bf16.gmra.mxu0 %v314
  %v537 = vpop.f32.mrf.mxu0
  %v538 = vadd.f32 0.0, %v537
  %v539 = vpop.f32.mrf.mxu0
  %v540 = vpop.f32.mrf.mxu0
  %v541 = vadd.f32 0.0, %v540
  %v542 = vpop.f32.mrf.mxu0
  %543 = vmatprep.mubr.bf16.mxu0 0
  %544 = vmatmul.mubr.bf16.gmra.mxu0 %v317
  %v545 = vpop.f32.mrf.mxu0
  %v546 = vadd.f32 0.0, %v545
  %v547 = vpop.f32.mrf.mxu0
  %v548 = vpop.f32.mrf.mxu0
  %v549 = vadd.f32 0.0, %v548
  %v550 = vpop.f32.mrf.mxu0
  %551 = vmatprep.mubr.bf16.mxu0 0
  %552 = vmatmul.mubr.bf16.gmra.mxu0 %v320
  %v553 = vpop.f32.mrf.mxu0
  %v554 = vadd.f32 0.0, %v553
  %v555 = vpop.f32.mrf.mxu0
  %v556 = vpop.f32.mrf.mxu0
  %v557 = vadd.f32 0.0, %v556
  %v558 = vpop.f32.mrf.mxu0
  %559 = vmatprep.mubr.bf16.mxu0 0
  %560 = vmatmul.mubr.bf16.gmra.mxu0 %v323
  %v561 = vpop.f32.mrf.mxu0
  %v562 = vadd.f32 0.0, %v561
  %v563 = vpop.f32.mrf.mxu0
  %v564 = vpop.f32.mrf.mxu0
  %v565 = vadd.f32 0.0, %v564
  %v566 = vpop.f32.mrf.mxu0
  %567 = vmatprep.mubr.bf16.mxu0 0
  %568 = vmatmul.mubr.bf16.gmra.mxu0 %v326
  %v569 = vpop.f32.mrf.mxu0
  %v570 = vadd.f32 0.0, %v569
  %v571 = vpop.f32.mrf.mxu0
  %v572 = vpop.f32.mrf.mxu0
  %v573 = vadd.f32 0.0, %v572
  %v574 = vpop.f32.mrf.mxu0
  %575 = vmatprep.mubr.bf16.mxu0 0
  %576 = vmatmul.mubr.bf16.gmra.mxu0 %v329
  %v577 = vpop.f32.mrf.mxu0
  %v578 = vadd.f32 0.0, %v577
  %v579 = vpop.f32.mrf.mxu0
  %v580 = vpop.f32.mrf.mxu0
  %v581 = vadd.f32 0.0, %v580
  %v582 = vpop.f32.mrf.mxu0
  %583 = vmatprep.mubr.bf16.mxu0 0
  %584 = vmatmul.mubr.bf16.gmra.mxu0 %v332
  %v585 = vpop.f32.mrf.mxu0
  %v586 = vadd.f32 0.0, %v585
  %v587 = vpop.f32.mrf.mxu0
  %v588 = vpop.f32.mrf.mxu0
  %v589 = vadd.f32 0.0, %v588
  %v590 = vpop.f32.mrf.mxu0
  %591 = vmatprep.mubr.bf16.mxu0 0
  %592 = vmatmul.mubr.bf16.gmra.mxu0 %v335
  %v593 = vpop.f32.mrf.mxu0
  %v594 = vadd.f32 0.0, %v593
  %v595 = vpop.f32.mrf.mxu0
  %v596 = vpop.f32.mrf.mxu0
  %v597 = vadd.f32 0.0, %v596
  %v598 = vpop.f32.mrf.mxu0
  %599 = vmatprep.mubr.bf16.mxu0 0
  %600 = vmatmul.mubr.bf16.gmra.mxu0 %v338
  %v601 = vpop.f32.mrf.mxu0
  %v602 = vadd.f32 0.0, %v601
  %v603 = vpop.f32.mrf.mxu0
  %v604 = vpop.f32.mrf.mxu0
  %v605 = vadd.f32 0.0, %v604
  %v606 = vpop.f32.mrf.mxu0
  %607 = vmatprep.mubr.bf16.mxu0 0
  %608 = vmatmul.mubr.bf16.gmra.mxu0 %v341
  %v609 = vpop.f32.mrf.mxu0
  %v610 = vadd.f32 0.0, %v609
  %v611 = vpop.f32.mrf.mxu0
  %v612 = vpop.f32.mrf.mxu0
  %v613 = vadd.f32 0.0, %v612
  %v614 = vpop.f32.mrf.mxu0
  %615 = vmatprep.mubr.bf16.mxu0 0
  %616 = vmatmul.mubr.bf16.gmra.mxu0 %v344
  %v617 = vpop.f32.mrf.mxu0
  %v618 = vadd.f32 0.0, %v617
  %v619 = vpop.f32.mrf.mxu0
  %v620 = vpop.f32.mrf.mxu0
  %v621 = vadd.f32 0.0, %v620
  %v622 = vpop.f32.mrf.mxu0
  %623 = vmatprep.mubr.bf16.mxu0 0
  %624 = vmatmul.mubr.bf16.gmra.mxu0 %v347
  %v625 = vpop.f32.mrf.mxu0
  %v626 = vadd.f32 0.0, %v625
  %v627 = vpop.f32.mrf.mxu0
  %v628 = vpop.f32.mrf.mxu0
  %v629 = vadd.f32 0.0, %v628
  %v630 = vpop.f32.mrf.mxu0
  %631 = vmatprep.mubr.bf16.mxu0 0
  %632 = vmatmul.mubr.bf16.gmra.mxu0 %v350
  %v633 = vpop.f32.mrf.mxu0
  %v634 = vadd.f32 0.0, %v633
  %v635 = vpop.f32.mrf.mxu0
  %v636 = vpop.f32.mrf.mxu0
  %v637 = vadd.f32 0.0, %v636
  %v638 = vpop.f32.mrf.mxu0
  %639 = vmatprep.mubr.bf16.mxu0 0
  %640 = vmatmul.mubr.bf16.gmra.mxu0 %v353
  %v641 = vpop.f32.mrf.mxu0
  %v642 = vadd.f32 0.0, %v641
  %v643 = vpop.f32.mrf.mxu0
  %v644 = vpop.f32.mrf.mxu0
  %v645 = vadd.f32 0.0, %v644
  %v646 = vpop.f32.mrf.mxu0
  %647 = vdwg.mxu0
  %648 = vst [vmem:[%s2] sm:$0xff] %v394
  %649 = vst [vmem:[%s2 + $0x8] sm:$0xff] %v397
  %650 = vst [vmem:[%s2 + $0x10] sm:$0xff] %v402
  %651 = vst [vmem:[%s2 + $0x18] sm:$0xff] %v405
  %652 = vst [vmem:[%s2 + $0x20] sm:$0xff] %v410
  %653 = vst [vmem:[%s2 + $0x28] sm:$0xff] %v413
  %654 = vst [vmem:[%s2 + $0x30] sm:$0xff] %v418
  %655 = vst [vmem:[%s2 + $0x38] sm:$0xff] %v421
  %656 = vst [vmem:[%s2 + $0x40] sm:$0xff] %v426
  %657 = vst [vmem:[%s2 + $0x48] sm:$0xff] %v429
  %658 = vst [vmem:[%s2 + $0x50] sm:$0xff] %v434
  %659 = vst [vmem:[%s2 + $0x58] sm:$0xff] %v437
  %660 = vst [vmem:[%s2 + $0x60] sm:$0xff] %v442
  %661 = vst [vmem:[%s2 + $0x68] sm:$0xff] %v445
  %662 = vst [vmem:[%s2 + $0x70] sm:$0xff] %v450
  %663 = vst [vmem:[%s2 + $0x78] sm:$0xff] %v453
  %664 = vst [vmem:[%s2 + $0x80] sm:$0xff] %v458
  %665 = vst [vmem:[%s2 + $0x88] sm:$0xff] %v461
  %666 = vst [vmem:[%s2 + $0x90] sm:$0xff] %v466
  %667 = vst [vmem:[%s2 + $0x98] sm:$0xff] %v469
  %668 = vst [vmem:[%s2 + $0xa0] sm:$0xff] %v474
  %669 = vst [vmem:[%s2 + $0xa8] sm:$0xff] %v477
  %670 = vst [vmem:[%s2 + $0xb0] sm:$0xff] %v482
  %671 = vst [vmem:[%s2 + $0xb8] sm:$0xff] %v485
  %672 = vst [vmem:[%s2 + $0xc0] sm:$0xff] %v490
  %673 = vst [vmem:[%s2 + $0xc8] sm:$0xff] %v493
  %674 = vst [vmem:[%s2 + $0xd0] sm:$0xff] %v498
  %675 = vst [vmem:[%s2 + $0xd8] sm:$0xff] %v501
  %676 = vst [vmem:[%s2 + $0xe0] sm:$0xff] %v506
  %677 = vst [vmem:[%s2 + $0xe8] sm:$0xff] %v509
  %678 = vst [vmem:[%s2 + $0xf0] sm:$0xff] %v514
  %679 = vst [vmem:[%s2 + $0xf8] sm:$0xff] %v517
  %680 = vst [vmem:[%s2 + $0x100] sm:$0xff] %v522
  %681 = vst [vmem:[%s2 + $0x108] sm:$0xff] %v525
  %682 = vst [vmem:[%s2 + $0x110] sm:$0xff] %v530
  %683 = vst [vmem:[%s2 + $0x118] sm:$0xff] %v533
  %684 = vst [vmem:[%s2 + $0x120] sm:$0xff] %v538
  %685 = vst [vmem:[%s2 + $0x128] sm:$0xff] %v541
  %686 = vst [vmem:[%s2 + $0x130] sm:$0xff] %v546
  %687 = vst [vmem:[%s2 + $0x138] sm:$0xff] %v549
  %688 = vst [vmem:[%s2 + $0x140] sm:$0xff] %v554
  %689 = vst [vmem:[%s2 + $0x148] sm:$0xff] %v557
  %690 = vst [vmem:[%s2 + $0x150] sm:$0xff] %v562
  %691 = vst [vmem:[%s2 + $0x158] sm:$0xff] %v565
  %692 = vst [vmem:[%s2 + $0x160] sm:$0xff] %v570
  %693 = vst [vmem:[%s2 + $0x168] sm:$0xff] %v573
  %694 = vst [vmem:[%s2 + $0x170] sm:$0xff] %v578
  %695 = vst [vmem:[%s2 + $0x178] sm:$0xff] %v581
  %696 = vst [vmem:[%s2 + $0x180] sm:$0xff] %v586
  %697 = vst [vmem:[%s2 + $0x188] sm:$0xff] %v589
  %698 = vst [vmem:[%s2 + $0x190] sm:$0xff] %v594
  %699 = vst [vmem:[%s2 + $0x198] sm:$0xff] %v597
  %700 = vst [vmem:[%s2 + $0x1a0] sm:$0xff] %v602
  %701 = vst [vmem:[%s2 + $0x1a8] sm:$0xff] %v605
  %702 = vst [vmem:[%s2 + $0x1b0] sm:$0xff] %v610
  %703 = vst [vmem:[%s2 + $0x1b8] sm:$0xff] %v613
  %704 = vst [vmem:[%s2 + $0x1c0] sm:$0xff] %v618
  %705 = vst [vmem:[%s2 + $0x1c8] sm:$0xff] %v621
  %706 = vst [vmem:[%s2 + $0x1d0] sm:$0xff] %v626
  %707 = vst [vmem:[%s2 + $0x1d8] sm:$0xff] %v629
  %708 = vst [vmem:[%s2 + $0x1e0] sm:$0xff] %v634
  %709 = vst [vmem:[%s2 + $0x1e8] sm:$0xff] %v637
  %710 = vst [vmem:[%s2 + $0x1f0] sm:$0xff] %v642
  %711 = vst [vmem:[%s2 + $0x1f8] sm:$0xff] %v645
  %v712 = vadd.f32 %v394, %v397
  %v713 = vadd.f32 %v712, %v402
  %v714 = vadd.f32 %v713, %v405
  %v715 = vadd.f32 %v714, %v410
  %v716 = vadd.f32 %v715, %v413
  %v717 = vadd.f32 %v716, %v418
  %v718 = vadd.f32 %v717, %v421
  %v719 = vadd.f32 %v718, %v426
  %v720 = vadd.f32 %v719, %v429
  %v721 = vadd.f32 %v720, %v434
  %v722 = vadd.f32 %v721, %v437
  %v723 = vadd.f32 %v722, %v442
  %v724 = vadd.f32 %v723, %v445
  %v725 = vadd.f32 %v724, %v450
  %v726 = vadd.f32 %v725, %v453
  %v727 = vadd.f32 %v726, %v458
  %v728 = vadd.f32 %v727, %v461
  %v729 = vadd.f32 %v728, %v466
  %v730 = vadd.f32 %v729, %v469
  %v731 = vadd.f32 %v730, %v474
  %v732 = vadd.f32 %v731, %v477
  %v733 = vadd.f32 %v732, %v482
  %v734 = vadd.f32 %v733, %v485
  %v735 = vadd.f32 %v734, %v490
  %v736 = vadd.f32 %v735, %v493
  %v737 = vadd.f32 %v736, %v498
  %v738 = vadd.f32 %v737, %v501
  %v739 = vadd.f32 %v738, %v506
  %v740 = vadd.f32 %v739, %v509
  %v741 = vadd.f32 %v740, %v514
  %v742 = vadd.f32 %v741, %v517
  %v743 = vadd.f32 %v742, %v522
  %v744 = vadd.f32 %v743, %v525
  %v745 = vadd.f32 %v744, %v530
  %v746 = vadd.f32 %v745, %v533
  %v747 = vadd.f32 %v746, %v538
  %v748 = vadd.f32 %v747, %v541
  %v749 = vadd.f32 %v748, %v546
  %v750 = vadd.f32 %v749, %v549
  %v751 = vadd.f32 %v750, %v554
  %v752 = vadd.f32 %v751, %v557
  %v753 = vadd.f32 %v752, %v562
  %v754 = vadd.f32 %v753, %v565
  %v755 = vadd.f32 %v754, %v570
  %v756 = vadd.f32 %v755, %v573
  %v757 = vadd.f32 %v756, %v578
  %v758 = vadd.f32 %v757, %v581
  %v759 = vadd.f32 %v758, %v586
  %v760 = vadd.f32 %v759, %v589
  %v761 = vadd.f32 %v760, %v594
  %v762 = vadd.f32 %v761, %v597
  %v763 = vadd.f32 %v762, %v602
  %v764 = vadd.f32 %v763, %v605
  %v765 = vadd.f32 %v764, %v610
  %v766 = vadd.f32 %v765, %v613
  %v767 = vadd.f32 %v766, %v618
  %v768 = vadd.f32 %v767, %v621
  %v769 = vadd.f32 %v768, %v626
  %v770 = vadd.f32 %v769, %v629
  %v771 = vadd.f32 %v770, %v634
  %v772 = vadd.f32 %v771, %v637
  %v773 = vadd.f32 %v772, %v642
  %v774 = vadd.f32 %v773, %v645
  %v775 = vrot.slane %v774, 4
  %v776 = vadd.f32 %v774, %v775
  %v777 = vrot.slane %v776, 2
  %v778 = vadd.f32 %v776, %v777
  %v779 = vrot.slane %v778, 1
  %v780 = vadd.f32 %v778, %v779
  %781 = vst [vmem:[%s3] sm:$0x1] %v780
  %v782 = vmul.f32 %v394, %v394
  %v783 = vmul.f32 %v397, %v397
  %v784 = vmul.f32 %v402, %v402
  %v785 = vmul.f32 %v405, %v405
  %v786 = vmul.f32 %v410, %v410
  %v787 = vmul.f32 %v413, %v413
  %v788 = vmul.f32 %v418, %v418
  %v789 = vmul.f32 %v421, %v421
  %v790 = vmul.f32 %v426, %v426
  %v791 = vmul.f32 %v429, %v429
  %v792 = vmul.f32 %v434, %v434
  %v793 = vmul.f32 %v437, %v437
  %v794 = vmul.f32 %v442, %v442
  %v795 = vmul.f32 %v445, %v445
  %v796 = vmul.f32 %v450, %v450
  %v797 = vmul.f32 %v453, %v453
  %v798 = vmul.f32 %v458, %v458
  %v799 = vmul.f32 %v461, %v461
  %v800 = vmul.f32 %v466, %v466
  %v801 = vmul.f32 %v469, %v469
  %v802 = vmul.f32 %v474, %v474
  %v803 = vmul.f32 %v477, %v477
  %v804 = vmul.f32 %v482, %v482
  %v805 = vmul.f32 %v485, %v485
  %v806 = vmul.f32 %v490, %v490
  %v807 = vmul.f32 %v493, %v493
  %v808 = vmul.f32 %v498, %v498
  %v809 = vmul.f32 %v501, %v501
  %v810 = vmul.f32 %v506, %v506
  %v811 = vmul.f32 %v509, %v509
  %v812 = vmul.f32 %v514, %v514
  %v813 = vmul.f32 %v517, %v517
  %v814 = vmul.f32 %v522, %v522
  %v815 = vmul.f32 %v525, %v525
  %v816 = vmul.f32 %v530, %v530
  %v817 = vmul.f32 %v533, %v533
  %v818 = vmul.f32 %v538, %v538
  %v819 = vmul.f32 %v541, %v541
  %v820 = vmul.f32 %v546, %v546
  %v821 = vmul.f32 %v549, %v549
  %v822 = vmul.f32 %v554, %v554
  %v823 = vmul.f32 %v557, %v557
  %v824 = vmul.f32 %v562, %v562
  %v825 = vmul.f32 %v565, %v565
  %v826 = vmul.f32 %v570, %v570
  %v827 = vmul.f32 %v573, %v573
  %v828 = vmul.f32 %v578, %v578
  %v829 = vmul.f32 %v581, %v581
  %v830 = vmul.f32 %v586, %v586
  %v831 = vmul.f32 %v589, %v589
  %v832 = vmul.f32 %v594, %v594
  %v833 = vmul.f32 %v597, %v597
  %v834 = vmul.f32 %v602, %v602
  %v835 = vmul.f32 %v605, %v605
  %v836 = vmul.f32 %v610, %v610
  %v837 = vmul.f32 %v613, %v613
  %v838 = vmul.f32 %v618, %v618
  %v839 = vmul.f32 %v621, %v621
  %v840 = vmul.f32 %v626, %v626
  %v841 = vmul.f32 %v629, %v629
  %v842 = vmul.f32 %v634, %v634
  %v843 = vmul.f32 %v637, %v637
  %v844 = vmul.f32 %v642, %v642
  %v845 = vmul.f32 %v645, %v645
  %v846 = vadd.f32 %v782, %v783
  %v847 = vadd.f32 %v846, %v784
  %v848 = vadd.f32 %v847, %v785
  %v849 = vadd.f32 %v848, %v786
  %v850 = vadd.f32 %v849, %v787
  %v851 = vadd.f32 %v850, %v788
  %v852 = vadd.f32 %v851, %v789
  %v853 = vadd.f32 %v852, %v790
  %v854 = vadd.f32 %v853, %v791
  %v855 = vadd.f32 %v854, %v792
  %v856 = vadd.f32 %v855, %v793
  %v857 = vadd.f32 %v856, %v794
  %v858 = vadd.f32 %v857, %v795
  %v859 = vadd.f32 %v858, %v796
  %v860 = vadd.f32 %v859, %v797
  %v861 = vadd.f32 %v860, %v798
  %v862 = vadd.f32 %v861, %v799
  %v863 = vadd.f32 %v862, %v800
  %v864 = vadd.f32 %v863, %v801
  %v865 = vadd.f32 %v864, %v802
  %v866 = vadd.f32 %v865, %v803
  %v867 = vadd.f32 %v866, %v804
  %v868 = vadd.f32 %v867, %v805
  %v869 = vadd.f32 %v868, %v806
  %v870 = vadd.f32 %v869, %v807
  %v871 = vadd.f32 %v870, %v808
  %v872 = vadd.f32 %v871, %v809
  %v873 = vadd.f32 %v872, %v810
  %v874 = vadd.f32 %v873, %v811
  %v875 = vadd.f32 %v874, %v812
  %v876 = vadd.f32 %v875, %v813
  %v877 = vadd.f32 %v876, %v814
  %v878 = vadd.f32 %v877, %v815
  %v879 = vadd.f32 %v878, %v816
  %v880 = vadd.f32 %v879, %v817
  %v881 = vadd.f32 %v880, %v818
  %v882 = vadd.f32 %v881, %v819
  %v883 = vadd.f32 %v882, %v820
  %v884 = vadd.f32 %v883, %v821
  %v885 = vadd.f32 %v884, %v822
  %v886 = vadd.f32 %v885, %v823
  %v887 = vadd.f32 %v886, %v824
  %v888 = vadd.f32 %v887, %v825
  %v889 = vadd.f32 %v888, %v826
  %v890 = vadd.f32 %v889, %v827
  %v891 = vadd.f32 %v890, %v828
  %v892 = vadd.f32 %v891, %v829
  %v893 = vadd.f32 %v892, %v830
  %v894 = vadd.f32 %v893, %v831
  %v895 = vadd.f32 %v894, %v832
  %v896 = vadd.f32 %v895, %v833
  %v897 = vadd.f32 %v896, %v834
  %v898 = vadd.f32 %v897, %v835
  %v899 = vadd.f32 %v898, %v836
  %v900 = vadd.f32 %v899, %v837
  %v901 = vadd.f32 %v900, %v838
  %v902 = vadd.f32 %v901, %v839
  %v903 = vadd.f32 %v902, %v840
  %v904 = vadd.f32 %v903, %v841
  %v905 = vadd.f32 %v904, %v842
  %v906 = vadd.f32 %v905, %v843
  %v907 = vadd.f32 %v906, %v844
  %v908 = vadd.f32 %v907, %v845
  %v909 = vrot.slane %v908, 4
  %v910 = vadd.f32 %v908, %v909
  %v911 = vrot.slane %v910, 2
  %v912 = vadd.f32 %v910, %v911
  %v913 = vrot.slane %v912, 1
  %v914 = vadd.f32 %v912, %v913
  %915 = vst [vmem:[%s3 + $0x1] sm:$0x1] %v914
  // Predicated region
  $region10: #{discrim_block_forward.4} parent=0 // pred_check
    _
  $region11: #{discrim_block_forward.4} parent=0 // pred_check_branch
    %917 = sbr.rel (0) target = $region13
  $region12: #{discrim_block_forward.4} parent=0 // pred_region
    _
  $region13: #{discrim_block_forward.4} parent=0 // pred_fallthru
    _
  // Predicated region
  $region14: #{discrim_block_forward.4} parent=0 // pred_check
    _
  $region15: #{discrim_block_forward.4} parent=0 // pred_check_branch
    %919 = sbr.rel (0) target = $region17
  $region16: #{discrim_block_forward.4} parent=0 // pred_region
    _
  $region17: #{discrim_block_forward.4} parent=0 // pred_fallthru
    _
  // Predicated region
  $region18: #{discrim_block_forward.4} parent=0 // pred_check
    _
  $region19: #{discrim_block_forward.4} parent=0 // pred_check_branch
    %921 = sbr.rel (0) target = $region21
  $region20: #{discrim_block_forward.4} parent=0 // pred_region
    _
  $region21: #{discrim_block_forward.4} parent=0 // pred_fallthru
    _
  // Predicated region
  $region22: #{discrim_block_forward.4} parent=0 // pred_check
    _
  $region23: #{discrim_block_forward.4} parent=0 // pred_check_branch
    %923 = sbr.rel (0) target = $region25
  $region24: #{discrim_block_forward.4} parent=0 // pred_region
    _
  $region25: #{discrim_block_forward.4} parent=0 // pred_fallthru
    _

// kernel: discrim_block_forward.7
$region0: #{discrim_block_forward.7}
  #allocation0 [shape = 'u32[]', space=smem, size = 0x4, offset = 0x4, fixed_abs, tag = 'smem constant byte address 0x4 - core index']
  #allocation1 [shape = 'u32[144,128]{1,0:T(1,128)}', space=vmem, size = 0x12000, scoped, tag = 'internal scratch']
  %s0 = inlined_call_operand.vmem [shape: f32[128,128], index: 0, kind: input, shape index: {}]
  %s1 = inlined_call_operand.vmem [shape: f32[1,128], index: 1, kind: input, shape index: {}]
  %s2 = inlined_call_operand.vmem [shape: f32[1,128], index: 2, kind: input, shape index: {}]
  %s3 = inlined_call_operand.vmem [shape: f32[128,128], index: 3, kind: output, shape index: {}]
  %s4 = sld [smem:[#allocation0]]
  $region22: #{discrim_block_forward.7} parent=0
    _
  %s6 = ssub.s32 1, %s4
  %s7 = scalar_select 0, %s6, %s4
  // Predicated region
  $region2: #{discrim_block_forward.7} parent=0 // pred_check
    _
  $region3: #{discrim_block_forward.7} parent=0 // pred_check_branch
    %9 = sbr.rel (0) target = $region5
  $region4: #{discrim_block_forward.7} parent=0 // pred_region
    _
  $region5: #{discrim_block_forward.7} parent=0 // pred_fallthru
    _
  // Predicated region
  $region6: #{discrim_block_forward.7} parent=0 // pred_check
    _
  $region7: #{discrim_block_forward.7} parent=0 // pred_check_branch
    %11 = sbr.rel (0) target = $region9
  $region8: #{discrim_block_forward.7} parent=0 // pred_region
    _
  $region9: #{discrim_block_forward.7} parent=0 // pred_fallthru
    _
  // Predicated region
  $region10: #{discrim_block_forward.7} parent=0 // pred_check
    _
  $region11: #{discrim_block_forward.7} parent=0 // pred_check_branch
    %13 = sbr.rel (0) target = $region13
  $region12: #{discrim_block_forward.7} parent=0 // pred_region
    _
  $region13: #{discrim_block_forward.7} parent=0 // pred_fallthru
    _
  %v14 = vld [vmem:[%s0] sm:$0xff]
  %v15 = vld [vmem:[%s0 + $0x8] sm:$0xff]
  %v16 = vld [vmem:[%s0 + $0x10] sm:$0xff]
  %v17 = vld [vmem:[%s0 + $0x18] sm:$0xff]
  %v18 = vld [vmem:[%s0 + $0x20] sm:$0xff]
  %v19 = vld [vmem:[%s0 + $0x28] sm:$0xff]
  %v20 = vld [vmem:[%s0 + $0x30] sm:$0xff]
  %v21 = vld [vmem:[%s0 + $0x38] sm:$0xff]
  %v22 = vld [vmem:[%s0 + $0x40] sm:$0xff]
  %v23 = vld [vmem:[%s0 + $0x48] sm:$0xff]
  %v24 = vld [vmem:[%s0 + $0x50] sm:$0xff]
  %v25 = vld [vmem:[%s0 + $0x58] sm:$0xff]
  %v26 = vld [vmem:[%s0 + $0x60] sm:$0xff]
  %v27 = vld [vmem:[%s0 + $0x68] sm:$0xff]
  %v28 = vld [vmem:[%s0 + $0x70] sm:$0xff]
  %v29 = vld [vmem:[%s0 + $0x78] sm:$0xff]
  %v30 = vld [vmem:[%s1] sm:$0x1]
  %v32 = vlaneseq
  %v33 = vshrl.u32 %v32, 7
  %v34 = vsub.s32 0, %v33
  %v35 = vrot.slane %v30, %v34
  %v37 = vmul.f32 %v14, %v35
  %v38 = vmul.f32 %v15, %v35
  %v39 = vmul.f32 %v16, %v35
  %v40 = vmul.f32 %v17, %v35
  %v41 = vmul.f32 %v18, %v35
  %v42 = vmul.f32 %v19, %v35
  %v43 = vmul.f32 %v20, %v35
  %v44 = vmul.f32 %v21, %v35
  %v45 = vmul.f32 %v22, %v35
  %v46 = vmul.f32 %v23, %v35
  %v47 = vmul.f32 %v24, %v35
  %v48 = vmul.f32 %v25, %v35
  %v49 = vmul.f32 %v26, %v35
  %v50 = vmul.f32 %v27, %v35
  %v51 = vmul.f32 %v28, %v35
  %v52 = vmul.f32 %v29, %v35
  %v53 = vld [vmem:[%s2] sm:$0x1]
  %v55 = vlaneseq
  %v56 = vshrl.u32 %v55, 7
  %v57 = vsub.s32 0, %v56
  %v58 = vrot.slane %v53, %v57
  %v60 = vadd.f32 %v37, %v58
  %v61 = vadd.f32 %v38, %v58
  %v62 = vadd.f32 %v39, %v58
  %v63 = vadd.f32 %v40, %v58
  %v64 = vadd.f32 %v41, %v58
  %v65 = vadd.f32 %v42, %v58
  %v66 = vadd.f32 %v43, %v58
  %v67 = vadd.f32 %v44, %v58
  %v68 = vadd.f32 %v45, %v58
  %v69 = vadd.f32 %v46, %v58
  %v70 = vadd.f32 %v47, %v58
  %v71 = vadd.f32 %v48, %v58
  %v72 = vadd.f32 %v49, %v58
  %v73 = vadd.f32 %v50, %v58
  %v74 = vadd.f32 %v51, %v58
  %v75 = vadd.f32 %v52, %v58
  %vm76 = vcmp.ge.f32.partialorder %v60, 0.0
  %vm77 = vcmp.ge.f32.partialorder %v61, 0.0
  %vm78 = vcmp.ge.f32.partialorder %v62, 0.0
  %vm79 = vcmp.ge.f32.partialorder %v63, 0.0
  %vm80 = vcmp.ge.f32.partialorder %v64, 0.0
  %vm81 = vcmp.ge.f32.partialorder %v65, 0.0
  %vm82 = vcmp.ge.f32.partialorder %v66, 0.0
  %vm83 = vcmp.ge.f32.partialorder %v67, 0.0
  %vm84 = vcmp.ge.f32.partialorder %v68, 0.0
  %vm85 = vcmp.ge.f32.partialorder %v69, 0.0
  %vm86 = vcmp.ge.f32.partialorder %v70, 0.0
  %vm87 = vcmp.ge.f32.partialorder %v71, 0.0
  %vm88 = vcmp.ge.f32.partialorder %v72, 0.0
  %vm89 = vcmp.ge.f32.partialorder %v73, 0.0
  %vm90 = vcmp.ge.f32.partialorder %v74, 0.0
  %vm91 = vcmp.ge.f32.partialorder %v75, 0.0
  %v92 = vmul.f32 %v60, 0.01
  %v93 = vmul.f32 %v61, 0.01
  %v94 = vmul.f32 %v62, 0.01
  %v95 = vmul.f32 %v63, 0.01
  %v96 = vmul.f32 %v64, 0.01
  %v97 = vmul.f32 %v65, 0.01
  %v98 = vmul.f32 %v66, 0.01
  %v99 = vmul.f32 %v67, 0.01
  %v100 = vmul.f32 %v68, 0.01
  %v101 = vmul.f32 %v69, 0.01
  %v102 = vmul.f32 %v70, 0.01
  %v103 = vmul.f32 %v71, 0.01
  %v104 = vmul.f32 %v72, 0.01
  %v105 = vmul.f32 %v73, 0.01
  %v106 = vmul.f32 %v74, 0.01
  %v107 = vmul.f32 %v75, 0.01
  %v108 = vsel %vm76, %v60, %v92
  %v109 = vsel %vm77, %v61, %v93
  %v110 = vsel %vm78, %v62, %v94
  %v111 = vsel %vm79, %v63, %v95
  %v112 = vsel %vm80, %v64, %v96
  %v113 = vsel %vm81, %v65, %v97
  %v114 = vsel %vm82, %v66, %v98
  %v115 = vsel %vm83, %v67, %v99
  %v116 = vsel %vm84, %v68, %v100
  %v117 = vsel %vm85, %v69, %v101
  %v118 = vsel %vm86, %v70, %v102
  %v119 = vsel %vm87, %v71, %v103
  %v120 = vsel %vm88, %v72, %v104
  %v121 = vsel %vm89, %v73, %v105
  %v122 = vsel %vm90, %v74, %v106
  %v123 = vsel %vm91, %v75, %v107
  %124 = vst [vmem:[%s3] sm:$0xff] %v108
  %125 = vst [vmem:[%s3 + $0x8] sm:$0xff] %v109
  %126 = vst [vmem:[%s3 + $0x10] sm:$0xff] %v110
  %127 = vst [vmem:[%s3 + $0x18] sm:$0xff] %v111
  %128 = vst [vmem:[%s3 + $0x20] sm:$0xff] %v112
  %129 = vst [vmem:[%s3 + $0x28] sm:$0xff] %v113
  %130 = vst [vmem:[%s3 + $0x30] sm:$0xff] %v114
  %131 = vst [vmem:[%s3 + $0x38] sm:$0xff] %v115
  %132 = vst [vmem:[%s3 + $0x40] sm:$0xff] %v116
  %133 = vst [vmem:[%s3 + $0x48] sm:$0xff] %v117
  %134 = vst [vmem:[%s3 + $0x50] sm:$0xff] %v118
  %135 = vst [vmem:[%s3 + $0x58] sm:$0xff] %v119
  %136 = vst [vmem:[%s3 + $0x60] sm:$0xff] %v120
  %137 = vst [vmem:[%s3 + $0x68] sm:$0xff] %v121
  %138 = vst [vmem:[%s3 + $0x70] sm:$0xff] %v122
  %139 = vst [vmem:[%s3 + $0x78] sm:$0xff] %v123
  // Predicated region
  $region14: #{discrim_block_forward.7} parent=0 // pred_check
    _
  $region15: #{discrim_block_forward.7} parent=0 // pred_check_branch
    %141 = sbr.rel (0) target = $region17
  $region16: #{discrim_block_forward.7} parent=0 // pred_region
    _
  $region17: #{discrim_block_forward.7} parent=0 // pred_fallthru
    _
  // Predicated region
  $region18: #{discrim_block_forward.7} parent=0 // pred_check
    _
  $region19: #{discrim_block_forward.7} parent=0 // pred_check_branch
    %143 = sbr.rel (0) target = $region21
  $region20: #{discrim_block_forward.7} parent=0 // pred_region
    _
  $region21: #{discrim_block_forward.7} parent=0 // pred_fallthru
    _

// kernel: discrim_block_forward.6
$region0: #{discrim_block_forward.6}
  #allocation0 [shape = 'u32[]', space=smem, size = 0x4, offset = 0x4, fixed_abs, tag = 'smem constant byte address 0x4 - core index']
  #allocation1 [shape = 'u32[144,128]{1,0:T(1,128)}', space=vmem, size = 0x12000, scoped, tag = 'internal scratch']
  %s0 = inlined_call_operand.vmem [shape: bf16[128,72], index: 0, kind: input, shape index: {}]
  %s1 = inlined_call_operand.vmem [shape: bf16[72,128], index: 1, kind: input, shape index: {}]
  %s2 = inlined_call_operand.vmem [shape: f32[128,128], index: 2, kind: output, shape index: {0}]
  %s3 = inlined_call_operand.vmem [shape: f32[1,8,128], index: 3, kind: output, shape index: {1}]
  %4 = xla_tuple %s2, %s3
  %s5 = sld [smem:[#allocation0]]
  $region26: #{discrim_block_forward.6} parent=0
    _
  %s7 = ssub.s32 1, %s5
  %s8 = scalar_select 0, %s7, %s5
  // Predicated region
  $region2: #{discrim_block_forward.6} parent=0 // pred_check
    _
  $region3: #{discrim_block_forward.6} parent=0 // pred_check_branch
    %10 = sbr.rel (0) target = $region5
  $region4: #{discrim_block_forward.6} parent=0 // pred_region
    _
  $region5: #{discrim_block_forward.6} parent=0 // pred_fallthru
    _
  // Predicated region
  $region6: #{discrim_block_forward.6} parent=0 // pred_check
    _
  $region7: #{discrim_block_forward.6} parent=0 // pred_check_branch
    %12 = sbr.rel (0) target = $region9
  $region8: #{discrim_block_forward.6} parent=0 // pred_region
    _
  $region9: #{discrim_block_forward.6} parent=0 // pred_fallthru
    _
  %v14 = vld [vmem:[%s0] sm:$0xf]
  %v15 = vld [vmem:[%s0 + $0x4] sm:$0xf]
  %v16 = vld [vmem:[%s0 + $0x8] sm:$0xf]
  %v17 = vld [vmem:[%s0 + $0xc] sm:$0xf]
  %v18 = vld [vmem:[%s0 + $0x10] sm:$0xf]
  %v19 = vld [vmem:[%s0 + $0x14] sm:$0xf]
  %v20 = vld [vmem:[%s0 + $0x18] sm:$0xf]
  %v21 = vld [vmem:[%s0 + $0x1c] sm:$0xf]
  %v22 = vld [vmem:[%s0 + $0x20] sm:$0xf]
  %v23 = vld [vmem:[%s0 + $0x24] sm:$0xf]
  %v24 = vld [vmem:[%s0 + $0x28] sm:$0xf]
  %v25 = vld [vmem:[%s0 + $0x2c] sm:$0xf]
  %v26 = vld [vmem:[%s0 + $0x30] sm:$0xf]
  %v27 = vld [vmem:[%s0 + $0x34] sm:$0xf]
  %v28 = vld [vmem:[%s0 + $0x38] sm:$0xf]
  %v29 = vld [vmem:[%s0 + $0x3c] sm:$0xf]
  %v30 = vld [vmem:[%s1] sm:$0xf]
  %v31 = vld [vmem:[%s1 + $0x4] sm:$0xf]
  %v32 = vld [vmem:[%s1 + $0x8] sm:$0xf]
  %v33 = vld [vmem:[%s1 + $0xc] sm:$0xf]
  %v34 = vld [vmem:[%s1 + $0x10] sm:$0xf]
  %v35 = vld [vmem:[%s1 + $0x14] sm:$0xf]
  %v36 = vld [vmem:[%s1 + $0x18] sm:$0xf]
  %v37 = vld [vmem:[%s1 + $0x1c] sm:$0xf]
  %v38 = vld [vmem:[%s1 + $0x20] sm:$0xf]
  %v55 = vunpack.c.l.b16 %v14
  %v56 = vunpack.c.l.b16 %v15
  %v57 = vunpack.c.l.b16 %v16
  %v58 = vunpack.c.l.b16 %v17
  %v59 = vunpack.c.l.b16 %v18
  %v60 = vunpack.c.l.b16 %v19
  %v61 = vunpack.c.l.b16 %v20
  %v62 = vunpack.c.l.b16 %v21
  %v63 = vunpack.c.l.b16 %v22
  %v64 = vunpack.c.l.b16 %v23
  %v65 = vunpack.c.l.b16 %v24
  %v66 = vunpack.c.l.b16 %v25
  %v67 = vunpack.c.l.b16 %v26
  %v68 = vunpack.c.l.b16 %v27
  %v69 = vunpack.c.l.b16 %v28
  %v70 = vunpack.c.l.b16 %v29
  %v71 = vpack.c.b16 %v56, %v55
  %v72 = vpack.c.b16 %v58, %v57
  %v73 = vpack.c.b16 %v60, %v59
  %v74 = vpack.c.b16 %v62, %v61
  %v75 = vpack.c.b16 %v64, %v63
  %v76 = vpack.c.b16 %v66, %v65
  %v77 = vpack.c.b16 %v68, %v67
  %v78 = vpack.c.b16 %v70, %v69
  %v88 = vunpack.c.l.b16 %v30
  %v89 = vunpack.c.l.b16 %v31
  %v90 = vunpack.c.l.b16 %v32
  %v91 = vunpack.c.l.b16 %v33
  %v92 = vunpack.c.l.b16 %v34
  %v93 = vunpack.c.l.b16 %v35
  %v94 = vunpack.c.l.b16 %v36
  %v95 = vunpack.c.l.b16 %v37
  %v96 = vunpack.c.l.b16 %v38
  %v97 = vpack.c.b16 %v89, %v88
  %v98 = vpack.c.b16 %v91, %v90
  %v99 = vpack.c.b16 %v93, %v92
  %v100 = vpack.c.b16 %v95, %v94
  %v101 = vpack.c.b16 %v96, %v96
  %vm106 = vcmask 588800
  %v108 = vsel %vm106, %v71, 0
  %v111 = vsel %vm106, %v72, 0
  %v114 = vsel %vm106, %v73, 0
  %v117 = vsel %vm106, %v74, 0
  %v120 = vsel %vm106, %v75, 0
  %v123 = vsel %vm106, %v76, 0
  %v126 = vsel %vm106, %v77, 0
  %v129 = vsel %vm106, %v78, 0
  %vm131 = vcmask 1043456
  %v133 = vsel %vm131, %v101, 0
  %135 = vmatprep.subr.bf16.mxu0 0
  %136 = vmatpush1.bf16.msra.mxu0 0
  %137 = vmatprep.subr.bf16.mxu0 0
  %138 = vmatpush1.bf16.msra.mxu0 0
  %139 = vmatprep.subr.bf16.mxu0 0
  %140 = vmatpush1.bf16.msra.mxu0 0
  %141 = vmatprep.subr.bf16.mxu0 0
  %142 = vmatpush1.bf16.msra.mxu0 %v133
  %143 = vmatprep.subr.bf16.mxu0 0
  %144 = vmatpush1.bf16.msra.mxu0 %v100
  %145 = vmatprep.subr.bf16.mxu0 0
  %146 = vmatpush1.bf16.msra.mxu0 %v99
  %147 = vmatprep.subr.bf16.mxu0 0
  %148 = vmatpush1.bf16.msra.mxu0 %v98
  %149 = vmatprep.subr.bf16.mxu0 0
  %150 = vmatpush1.bf16.msra.mxu0 %v97
  %151 = vmatprep.subr.bf16.mxu0 0
  %152 = vmatpush2.bf16.msra.mxu0 0
  %153 = vmatprep.subr.bf16.mxu0 0
  %154 = vmatpush2.bf16.msra.mxu0 0
  %155 = vmatprep.subr.bf16.mxu0 0
  %156 = vmatpush2.bf16.msra.mxu0 0
  %157 = vmatprep.subr.bf16.mxu0 0
  %158 = vmatpush2.bf16.msra.mxu0 0
  %159 = vmatprep.subr.bf16.mxu0 0
  %160 = vmatpush2.bf16.msra.mxu0 0
  %161 = vmatprep.subr.bf16.mxu0 0
  %162 = vmatpush2.bf16.msra.mxu0 0
  %163 = vmatprep.subr.bf16.mxu0 0
  %164 = vmatpush2.bf16.msra.mxu0 0
  %165 = vmatprep.subr.bf16.mxu0 0
  %166 = vmatpush2.bf16.msra.mxu0 0
  %167 = vmatprep.mubr.bf16.mxu0 0
  %168 = vmatmul.mubr.bf16.gmra.mxu0 %v108
  %v169 = vpop.f32.mrf.mxu0
  %v170 = vadd.f32 0.0, %v169
  %v171 = vpop.f32.mrf.mxu0
  %v172 = vpop.f32.mrf.mxu0
  %v173 = vadd.f32 0.0, %v172
  %v174 = vpop.f32.mrf.mxu0
  %175 = vmatprep.mubr.bf16.mxu0 0
  %176 = vmatmul.mubr.bf16.gmra.mxu0 %v111
  %v177 = vpop.f32.mrf.mxu0
  %v178 = vadd.f32 0.0, %v177
  %v179 = vpop.f32.mrf.mxu0
  %v180 = vpop.f32.mrf.mxu0
  %v181 = vadd.f32 0.0, %v180
  %v182 = vpop.f32.mrf.mxu0
  %183 = vmatprep.mubr.bf16.mxu0 0
  %184 = vmatmul.mubr.bf16.gmra.mxu0 %v114
  %v185 = vpop.f32.mrf.mxu0
  %v186 = vadd.f32 0.0, %v185
  %v187 = vpop.f32.mrf.mxu0
  %v188 = vpop.f32.mrf.mxu0
  %v189 = vadd.f32 0.0, %v188
  %v190 = vpop.f32.mrf.mxu0
  %191 = vmatprep.mubr.bf16.mxu0 0
  %192 = vmatmul.mubr.bf16.gmra.mxu0 %v117
  %v193 = vpop.f32.mrf.mxu0
  %v194 = vadd.f32 0.0, %v193
  %v195 = vpop.f32.mrf.mxu0
  %v196 = vpop.f32.mrf.mxu0
  %v197 = vadd.f32 0.0, %v196
  %v198 = vpop.f32.mrf.mxu0
  %199 = vmatprep.mubr.bf16.mxu0 0
  %200 = vmatmul.mubr.bf16.gmra.mxu0 %v120
  %v201 = vpop.f32.mrf.mxu0
  %v202 = vadd.f32 0.0, %v201
  %v203 = vpop.f32.mrf.mxu0
  %v204 = vpop.f32.mrf.mxu0
  %v205 = vadd.f32 0.0, %v204
  %v206 = vpop.f32.mrf.mxu0
  %207 = vmatprep.mubr.bf16.mxu0 0
  %208 = vmatmul.mubr.bf16.gmra.mxu0 %v123
  %v209 = vpop.f32.mrf.mxu0
  %v210 = vadd.f32 0.0, %v209
  %v211 = vpop.f32.mrf.mxu0
  %v212 = vpop.f32.mrf.mxu0
  %v213 = vadd.f32 0.0, %v212
  %v214 = vpop.f32.mrf.mxu0
  %215 = vmatprep.mubr.bf16.mxu0 0
  %216 = vmatmul.mubr.bf16.gmra.mxu0 %v126
  %v217 = vpop.f32.mrf.mxu0
  %v218 = vadd.f32 0.0, %v217
  %v219 = vpop.f32.mrf.mxu0
  %v220 = vpop.f32.mrf.mxu0
  %v221 = vadd.f32 0.0, %v220
  %v222 = vpop.f32.mrf.mxu0
  %223 = vmatprep.mubr.bf16.mxu0 0
  %224 = vmatmul.mubr.bf16.gmra.mxu0 %v129
  %v225 = vpop.f32.mrf.mxu0
  %v226 = vadd.f32 0.0, %v225
  %v227 = vpop.f32.mrf.mxu0
  %v228 = vpop.f32.mrf.mxu0
  %v229 = vadd.f32 0.0, %v228
  %v230 = vpop.f32.mrf.mxu0
  %231 = vdwg.mxu0
  %232 = vst [vmem:[%s2] sm:$0xff] %v170
  %233 = vst [vmem:[%s2 + $0x8] sm:$0xff] %v173
  %234 = vst [vmem:[%s2 + $0x10] sm:$0xff] %v178
  %235 = vst [vmem:[%s2 + $0x18] sm:$0xff] %v181
  %236 = vst [vmem:[%s2 + $0x20] sm:$0xff] %v186
  %237 = vst [vmem:[%s2 + $0x28] sm:$0xff] %v189
  %238 = vst [vmem:[%s2 + $0x30] sm:$0xff] %v194
  %239 = vst [vmem:[%s2 + $0x38] sm:$0xff] %v197
  %240 = vst [vmem:[%s2 + $0x40] sm:$0xff] %v202
  %241 = vst [vmem:[%s2 + $0x48] sm:$0xff] %v205
  %242 = vst [vmem:[%s2 + $0x50] sm:$0xff] %v210
  %243 = vst [vmem:[%s2 + $0x58] sm:$0xff] %v213
  %244 = vst [vmem:[%s2 + $0x60] sm:$0xff] %v218
  %245 = vst [vmem:[%s2 + $0x68] sm:$0xff] %v221
  %246 = vst [vmem:[%s2 + $0x70] sm:$0xff] %v226
  %247 = vst [vmem:[%s2 + $0x78] sm:$0xff] %v229
  %v248 = vadd.f32 %v170, %v173
  %v249 = vadd.f32 %v248, %v178
  %v250 = vadd.f32 %v249, %v181
  %v251 = vadd.f32 %v250, %v186
  %v252 = vadd.f32 %v251, %v189
  %v253 = vadd.f32 %v252, %v194
  %v254 = vadd.f32 %v253, %v197
  %v255 = vadd.f32 %v254, %v202
  %v256 = vadd.f32 %v255, %v205
  %v257 = vadd.f32 %v256, %v210
  %v258 = vadd.f32 %v257, %v213
  %v259 = vadd.f32 %v258, %v218
  %v260 = vadd.f32 %v259, %v221
  %v261 = vadd.f32 %v260, %v226
  %v262 = vadd.f32 %v261, %v229
  %v263 = vrot.slane %v262, 4
  %v264 = vadd.f32 %v262, %v263
  %v265 = vrot.slane %v264, 2
  %v266 = vadd.f32 %v264, %v265
  %v267 = vrot.slane %v266, 1
  %v268 = vadd.f32 %v266, %v267
  %269 = vst [vmem:[%s3] sm:$0x1] %v268
  %v270 = vmul.f32 %v170, %v170
  %v271 = vmul.f32 %v173, %v173
  %v272 = vmul.f32 %v178, %v178
  %v273 = vmul.f32 %v181, %v181
  %v274 = vmul.f32 %v186, %v186
  %v275 = vmul.f32 %v189, %v189
  %v276 = vmul.f32 %v194, %v194
  %v277 = vmul.f32 %v197, %v197
  %v278 = vmul.f32 %v202, %v202
  %v279 = vmul.f32 %v205, %v205
  %v280 = vmul.f32 %v210, %v210
  %v281 = vmul.f32 %v213, %v213
  %v282 = vmul.f32 %v218, %v218
  %v283 = vmul.f32 %v221, %v221
  %v284 = vmul.f32 %v226, %v226
  %v285 = vmul.f32 %v229, %v229
  %v286 = vadd.f32 %v270, %v271
  %v287 = vadd.f32 %v286, %v272
  %v288 = vadd.f32 %v287, %v273
  %v289 = vadd.f32 %v288, %v274
  %v290 = vadd.f32 %v289, %v275
  %v291 = vadd.f32 %v290, %v276
  %v292 = vadd.f32 %v291, %v277
  %v293 = vadd.f32 %v292, %v278
  %v294 = vadd.f32 %v293, %v279
  %v295 = vadd.f32 %v294, %v280
  %v296 = vadd.f32 %v295, %v281
  %v297 = vadd.f32 %v296, %v282
  %v298 = vadd.f32 %v297, %v283
  %v299 = vadd.f32 %v298, %v284
  %v300 = vadd.f32 %v299, %v285
  %v301 = vrot.slane %v300, 4
  %v302 = vadd.f32 %v300, %v301
  %v303 = vrot.slane %v302, 2
  %v304 = vadd.f32 %v302, %v303
  %v305 = vrot.slane %v304, 1
  %v306 = vadd.f32 %v304, %v305
  %307 = vst [vmem:[%s3 + $0x1] sm:$0x1] %v306
  // Predicated region
  $region10: #{discrim_block_forward.6} parent=0 // pred_check
    _
  $region11: #{discrim_block_forward.6} parent=0 // pred_check_branch
    %309 = sbr.rel (0) target = $region13
  $region12: #{discrim_block_forward.6} parent=0 // pred_region
    _
  $region13: #{discrim_block_forward.6} parent=0 // pred_fallthru
    _
  // Predicated region
  $region14: #{discrim_block_forward.6} parent=0 // pred_check
    _
  $region15: #{discrim_block_forward.6} parent=0 // pred_check_branch
    %311 = sbr.rel (0) target = $region17
  $region16: #{discrim_block_forward.6} parent=0 // pred_region
    _
  $region17: #{discrim_block_forward.6} parent=0 // pred_fallthru
    _
  // Predicated region
  $region18: #{discrim_block_forward.6} parent=0 // pred_check
    _
  $region19: #{discrim_block_forward.6} parent=0 // pred_check_branch
    %313 = sbr.rel (0) target = $region21
  $region20: #{discrim_block_forward.6} parent=0 // pred_region
    _
  $region21: #{discrim_block_forward.6} parent=0 // pred_fallthru
    _
  // Predicated region
  $region22: #{discrim_block_forward.6} parent=0 // pred_check
    _
  $region23: #{discrim_block_forward.6} parent=0 // pred_check_branch
    %315 = sbr.rel (0) target = $region25
  $region24: #{discrim_block_forward.6} parent=0 // pred_region
    _
  $region25: #{discrim_block_forward.6} parent=0 // pred_fallthru
    _

</llo_original>
